<compile_context>
chip_gen: v7x
topology: tpu7x:2x2x1
jax: 0.10.0
libtpu: 0.0.40
codegen_flags: <defaults>
</compile_context>

<pallas_src>
import functools
import math

import jax
import jax.numpy as jnp
from jax import lax
from jax.experimental import pallas as pl
from jax.experimental.pallas import tpu as pltpu


def _layernorm(x, gamma, beta, eps=1e-5):
    # PyTorch nn.LayerNorm: biased variance over the last axis, f32 math.
    mean = jnp.mean(x, axis=-1, keepdims=True)
    var = jnp.mean((x - mean) ** 2, axis=-1, keepdims=True)
    return (x - mean) * lax.rsqrt(var + eps) * gamma + beta


def encoder_layer_kernel(
    xq_ref, xkv_ref,
    wq_ref, bq_ref, wkv_ref, bkv_ref,
    wo_ref, bo_ref,
    g1_ref, be1_ref,
    w1_ref, b1_ref, w2_ref, b2_ref,
    g2_ref, be2_ref,
    out_ref,
    *, n_heads, d_k, d_v,
):
    f32 = jnp.float32
    bf16 = jnp.bfloat16
    Hk = n_heads * d_k

    xq = xq_ref[...]          # (tq, D) f32 query tile (also the residual input)
    xkv = xkv_ref[...]        # (S,  D) f32 full-sequence slab for K/V
    xq_bf = xq.astype(bf16)
    xkv_bf = xkv.astype(bf16)

    # --- Q projection for this query tile; scale folded in before the score matmul ---
    q = jnp.dot(xq_bf, wq_ref[...], preferred_element_type=f32) + bq_ref[...]
    q_bf = (q * (1.0 / math.sqrt(d_k))).astype(bf16)              # (tq, Hk)

    # --- fused K|V projection for the whole sequence: one wide MXU matmul ---
    kv = jnp.dot(xkv_bf, wkv_ref[...], preferred_element_type=f32) + bkv_ref[...]
    kv_bf = kv.astype(bf16)                                        # (S, Hk + Hv)

    wo = wo_ref[...]                                               # (Hv, D) bf16

    # --- per-head attention; out-projection accumulated per head (no concat) ---
    acc = jnp.zeros(xq.shape, f32)                                 # (tq, D)
    for h in range(n_heads):
        qh = q_bf[:, h * d_k:(h + 1) * d_k]                        # (tq, d_k)
        kh = kv_bf[:, h * d_k:(h + 1) * d_k]                       # (S,  d_k)
        vh = kv_bf[:, Hk + h * d_v:Hk + (h + 1) * d_v]             # (S,  d_v)
        # contract last dims -> no explicit kh.T / XLU transpose
        scores = lax.dot_general(qh, kh, (((1,), (1,)), ((), ())),
                                 preferred_element_type=f32)       # (tq, S)
        scores = scores - jnp.max(scores, axis=-1, keepdims=True)
        p = jnp.exp(scores)
        attn = p * pl.reciprocal(jnp.sum(p, axis=-1, keepdims=True), approx=True)
        ho = jnp.dot(attn.astype(bf16), vh, preferred_element_type=f32)   # (tq, d_v)
        acc = acc + jnp.dot(ho.astype(bf16), wo[h * d_v:(h + 1) * d_v, :],
                            preferred_element_type=f32)
    proj = acc + bo_ref[...]

    # --- residual + LayerNorm1 (f32) ---
    h1 = _layernorm(xq + proj, g1_ref[...], be1_ref[...])

    # --- FeedForward: relu(h1 @ W1 + b1) @ W2 + b2, residual + LayerNorm2 ---
    ff = jnp.maximum(
        jnp.dot(h1.astype(bf16), w1_ref[...], preferred_element_type=f32) + b1_ref[...],
        0.0)
    ff2 = jnp.dot(ff.astype(bf16), w2_ref[...], preferred_element_type=f32) + b2_ref[...]
    h2 = _layernorm(h1 + ff2, g2_ref[...], be2_ref[...])

    out_ref[...] = h2.astype(out_ref.dtype)


def encoder_layer(src, params, *, n_heads, d_k, d_v):
    B, S, D = src.shape

    # Query-tile size: biggest "nice" tile that divides S, else full S.
    tq = S
    for t in (512, 256, 128):
        if S % t == 0:
            tq = t
            break

    bf16 = jnp.bfloat16
    # Pre-cast MXU weights to bf16 in the wrapper (halves their VMEM footprint,
    # which matters most on v7x's 64 MiB); biases / LayerNorm params stay f32.
    w_q = params["w_q"].astype(bf16)
    w_kv = jnp.concatenate([params["w_k"], params["w_v"]], axis=1).astype(bf16)
    b_kv = jnp.concatenate([params["b_k"], params["b_v"]], axis=1)
    w_o = params["w_o"].astype(bf16)
    w1 = params["w1"].astype(bf16)
    w2 = params["w2"].astype(bf16)

    kern = functools.partial(encoder_layer_kernel, n_heads=n_heads, d_k=d_k, d_v=d_v)

    def const_spec(arr):
        # Whole-array block, same block at every grid step (constant index map
        # -> Pallas skips the re-DMA across steps).
        nd = arr.ndim
        return pl.BlockSpec(arr.shape, lambda b, qi, _nd=nd: (0,) * _nd)

    param_arrays = [
        w_q, params["b_q"], w_kv, b_kv,
        w_o, params["b_o"],
        params["gamma1"], params["beta1"],
        w1, params["b1"], w2, params["b2"],
        params["gamma2"], params["beta2"],
    ]

    in_specs = [
        # query tile of src (batch dim squeezed out of the kernel view)
        pl.BlockSpec((pl.Squeezed(), tq, D), lambda b, qi: (b, qi, 0)),
        # full-sequence slab of src for K/V
        pl.BlockSpec((pl.Squeezed(), S, D), lambda b, qi: (b, 0, 0)),
    ] + [const_spec(a) for a in param_arrays]

    out_spec = pl.BlockSpec((pl.Squeezed(), tq, D), lambda b, qi: (b, qi, 0))

    return pl.pallas_call(
        kern,
        out_shape=jax.ShapeDtypeStruct((B, S, D), src.dtype),
        grid_spec=pltpu.PrefetchScalarGridSpec(
            num_scalar_prefetch=0,
            grid=(B, S // tq),
            in_specs=in_specs,
            out_specs=out_spec,
        ),
        compiler_params=pltpu.CompilerParams(
            dimension_semantics=("parallel", "parallel")),
    )(src, src, *param_arrays)


def init_params(key, d_model, d_k, d_v, n_heads, d_ff):
    """Deterministic xavier-uniform-style init; biases zero, LayerNorm weight=1/bias=0."""
    def xavier(key, fan_in, fan_out):
        limit = math.sqrt(6.0 / (fan_in + fan_out))
        return jax.random.uniform(key, (fan_in, fan_out), jnp.float32, -limit, limit)

    ks = jax.random.split(key, 6)
    Hk, Hv = d_k * n_heads, d_v * n_heads
    params = {
        # attention in-projections (used as x @ W, matching torch.matmul(input, weight))
        "w_q": xavier(ks[0], d_model, Hk),
        "b_q": jnp.zeros((1, Hk), jnp.float32),
        "w_k": xavier(ks[1], d_model, Hk),
        "b_k": jnp.zeros((1, Hk), jnp.float32),
        "w_v": xavier(ks[2], d_model, Hv),
        "b_v": jnp.zeros((1, Hv), jnp.float32),
        # out_proj is nn.Linear(Hv, d_model): weight (d_model, Hv); pass W.T = (Hv, d_model)
        "w_o": xavier(ks[3], Hv, d_model),
        "b_o": jnp.zeros((1, d_model), jnp.float32),
        # LayerNorm 1
        "gamma1": jnp.ones((1, d_model), jnp.float32),
        "beta1": jnp.zeros((1, d_model), jnp.float32),
        # FeedForward: linear1 (d_ff, d_model) -> pass W.T; linear2 (d_model, d_ff) -> pass W.T
        "w1": xavier(ks[4], d_model, d_ff),
        "b1": jnp.zeros((1, d_ff), jnp.float32),
        "w2": xavier(ks[5], d_ff, d_model),
        "b2": jnp.zeros((1, d_model), jnp.float32),
        # LayerNorm 2
        "gamma2": jnp.ones((1, d_model), jnp.float32),
        "beta2": jnp.zeros((1, d_model), jnp.float32),
    }
    return params


def reference_encoder_layer(src, params, *, n_heads, d_k, d_v):
    """Pure-JAX f32 reference mirroring the PyTorch forward (dropout=0, attn_mask=None)."""
    B, S, D = src.shape
    q = src @ params["w_q"] + params["b_q"]
    k = src @ params["w_k"] + params["b_k"]
    v = src @ params["w_v"] + params["b_v"]
    qh = q.reshape(B, S, n_heads, d_k).transpose(0, 2, 1, 3)
    kh = k.reshape(B, S, n_heads, d_k).transpose(0, 2, 1, 3)
    vh = v.reshape(B, S, n_heads, d_v).transpose(0, 2, 1, 3)
    scores = jnp.einsum("bhqd,bhkd->bhqk", qh, kh) / math.sqrt(d_k)
    attn = jax.nn.softmax(scores, axis=-1)
    ao = jnp.einsum("bhqk,bhkd->bhqd", attn, vh)
    ao = ao.transpose(0, 2, 1, 3).reshape(B, S, n_heads * d_v)
    out1 = ao @ params["w_o"] + params["b_o"]

    def ln(x, g, b, eps=1e-5):
        m = x.mean(-1, keepdims=True)
        var = ((x - m) ** 2).mean(-1, keepdims=True)
        return (x - m) / jnp.sqrt(var + eps) * g + b

    h1 = ln(src + out1, params["gamma1"], params["beta1"])
    ff = jnp.maximum(h1 @ params["w1"] + params["b1"], 0.0) @ params["w2"] + params["b2"]
    return ln(h1 + ff, params["gamma2"], params["beta2"])


if __name__ == "__main__":
    B, S = 2, 8
    d_model, d_k, d_v, n_heads, d_ff = 32, 8, 8, 4, 64

    key = jax.random.PRNGKey(0)
    k_src, k_par = jax.random.split(key)
    src = jax.random.normal(k_src, (B, S, d_model), jnp.float32)
    params = init_params(k_par, d_model, d_k, d_v, n_heads, d_ff)

    out = encoder_layer(src, params, n_heads=n_heads, d_k=d_k, d_v=d_v)
    out = jax.block_until_ready(out)

    ref = reference_encoder_layer(src, params, n_heads=n_heads, d_k=d_k, d_v=d_v)
    assert out.shape == (B, S, d_model)
    # bf16 MXU operands (f32 accumulation / f32 softmax & LayerNorm) loosen the
    # achievable tolerance vs. the pure-f32 reference; 5e-2 still catches any
    # structural error (those produce O(1) differences).
    assert jnp.allclose(out, ref, atol=5e-2, rtol=5e-2), (
        "mismatch vs reference", float(jnp.max(jnp.abs(out - ref))))

    print("KERNEL_OK")
</pallas_src>

<mosaic_0001>
module attributes {stable_mosaic.version = 11 : i64} {
  func.func @encoder_layer_kernel(%arg0: i32, %arg1: i32, %arg2: memref<1x8x32xf32, #tpu.memory_space<vmem>>, %arg3: memref<1x8x32xf32, #tpu.memory_space<vmem>>, %arg4: memref<32x32xbf16, #tpu.memory_space<vmem>>, %arg5: memref<1x32xf32, #tpu.memory_space<vmem>>, %arg6: memref<32x64xbf16, #tpu.memory_space<vmem>>, %arg7: memref<1x64xf32, #tpu.memory_space<vmem>>, %arg8: memref<32x32xbf16, #tpu.memory_space<vmem>>, %arg9: memref<1x32xf32, #tpu.memory_space<vmem>>, %arg10: memref<1x32xf32, #tpu.memory_space<vmem>>, %arg11: memref<1x32xf32, #tpu.memory_space<vmem>>, %arg12: memref<32x64xbf16, #tpu.memory_space<vmem>>, %arg13: memref<1x64xf32, #tpu.memory_space<vmem>>, %arg14: memref<64x32xbf16, #tpu.memory_space<vmem>>, %arg15: memref<1x32xf32, #tpu.memory_space<vmem>>, %arg16: memref<1x32xf32, #tpu.memory_space<vmem>>, %arg17: memref<1x32xf32, #tpu.memory_space<vmem>>, %arg18: memref<1x8x32xf32, #tpu.memory_space<vmem>>) attributes {dimension_semantics = [#tpu.dimension_semantics<parallel>, #tpu.dimension_semantics<parallel>], iteration_bounds = array<i64: 2, 1>, scalar_prefetch = 0 : i64, scratch_operands = 0 : i64, tpu.core_type = #tpu.core_type<tc>, window_params = [{transform_indices = @transform_0, window_bounds = array<i64: 1, 8, 32>}, {transform_indices = @transform_1, window_bounds = array<i64: 1, 8, 32>}, {pipeline_mode = #tpu.pipeline_mode<synchronous>, transform_indices = @transform_2, window_bounds = array<i64: 32, 32>}, {pipeline_mode = #tpu.pipeline_mode<synchronous>, transform_indices = @transform_3, window_bounds = array<i64: 1, 32>}, {pipeline_mode = #tpu.pipeline_mode<synchronous>, transform_indices = @transform_4, window_bounds = array<i64: 32, 64>}, {pipeline_mode = #tpu.pipeline_mode<synchronous>, transform_indices = @transform_5, window_bounds = array<i64: 1, 64>}, {pipeline_mode = #tpu.pipeline_mode<synchronous>, transform_indices = @transform_6, window_bounds = array<i64: 32, 32>}, {pipeline_mode = #tpu.pipeline_mode<synchronous>, transform_indices = @transform_7, window_bounds = array<i64: 1, 32>}, {pipeline_mode = #tpu.pipeline_mode<synchronous>, transform_indices = @transform_8, window_bounds = array<i64: 1, 32>}, {pipeline_mode = #tpu.pipeline_mode<synchronous>, transform_indices = @transform_9, window_bounds = array<i64: 1, 32>}, {pipeline_mode = #tpu.pipeline_mode<synchronous>, transform_indices = @transform_10, window_bounds = array<i64: 32, 64>}, {pipeline_mode = #tpu.pipeline_mode<synchronous>, transform_indices = @transform_11, window_bounds = array<i64: 1, 64>}, {pipeline_mode = #tpu.pipeline_mode<synchronous>, transform_indices = @transform_12, window_bounds = array<i64: 64, 32>}, {pipeline_mode = #tpu.pipeline_mode<synchronous>, transform_indices = @transform_13, window_bounds = array<i64: 1, 32>}, {pipeline_mode = #tpu.pipeline_mode<synchronous>, transform_indices = @transform_14, window_bounds = array<i64: 1, 32>}, {pipeline_mode = #tpu.pipeline_mode<synchronous>, transform_indices = @transform_15, window_bounds = array<i64: 1, 32>}, {transform_indices = @transform_16, window_bounds = array<i64: 1, 8, 32>}]} {
    %c0 = arith.constant 0 : index
    %c0_0 = arith.constant 0 : index
    %c0_1 = arith.constant 0 : index
    %0 = vector.load %arg2[%c0, %c0_0, %c0_1] : memref<1x8x32xf32, #tpu.memory_space<vmem>>, vector<1x8x32xf32>
    %1 = vector.shape_cast %0 : vector<1x8x32xf32> to vector<8x32xf32>
    %c0_2 = arith.constant 0 : index
    %c0_3 = arith.constant 0 : index
    %c0_4 = arith.constant 0 : index
    %2 = vector.load %arg3[%c0_2, %c0_3, %c0_4] : memref<1x8x32xf32, #tpu.memory_space<vmem>>, vector<1x8x32xf32>
    %3 = vector.shape_cast %2 : vector<1x8x32xf32> to vector<8x32xf32>
    %4 = arith.truncf %1 : vector<8x32xf32> to vector<8x32xbf16>
    %5 = arith.truncf %3 : vector<8x32xf32> to vector<8x32xbf16>
    %c0_5 = arith.constant 0 : index
    %c0_6 = arith.constant 0 : index
    %6 = vector.load %arg4[%c0_5, %c0_6] : memref<32x32xbf16, #tpu.memory_space<vmem>>, vector<32x32xbf16>
    %cst = arith.constant dense<0.000000e+00> : vector<8x32xf32>
    %7 = tpu.matmul %4, %6, %cst {dimension_numbers = #tpu.dot_dimension_numbers<[1], [0], [0], [1], [0, 0, 1, 1], [], []>} : vector<8x32xbf16>, vector<32x32xbf16>, vector<8x32xf32> -> vector<8x32xf32>
    %c0_7 = arith.constant 0 : index
    %c0_8 = arith.constant 0 : index
    %8 = vector.load %arg5[%c0_7, %c0_8] : memref<1x32xf32, #tpu.memory_space<vmem>>, vector<1x32xf32>
    %9 = vector.broadcast %8 : vector<1x32xf32> to vector<8x32xf32>
    %10 = arith.addf %7, %9 : vector<8x32xf32>
    %cst_9 = arith.constant 0.353553385 : f32
    %11 = vector.broadcast %cst_9 : f32 to vector<8x32xf32>
    %12 = arith.mulf %10, %11 : vector<8x32xf32>
    %13 = arith.truncf %12 : vector<8x32xf32> to vector<8x32xbf16>
    %c0_10 = arith.constant 0 : index
    %c0_11 = arith.constant 0 : index
    %14 = vector.load %arg6[%c0_10, %c0_11] : memref<32x64xbf16, #tpu.memory_space<vmem>>, vector<32x64xbf16>
    %cst_12 = arith.constant dense<0.000000e+00> : vector<8x64xf32>
    %15 = tpu.matmul %5, %14, %cst_12 {dimension_numbers = #tpu.dot_dimension_numbers<[1], [0], [0], [1], [0, 0, 1, 1], [], []>} : vector<8x32xbf16>, vector<32x64xbf16>, vector<8x64xf32> -> vector<8x64xf32>
    %c0_13 = arith.constant 0 : index
    %c0_14 = arith.constant 0 : index
    %16 = vector.load %arg7[%c0_13, %c0_14] : memref<1x64xf32, #tpu.memory_space<vmem>>, vector<1x64xf32>
    %17 = vector.broadcast %16 : vector<1x64xf32> to vector<8x64xf32>
    %18 = arith.addf %15, %17 : vector<8x64xf32>
    %19 = arith.truncf %18 : vector<8x64xf32> to vector<8x64xbf16>
    %c0_15 = arith.constant 0 : index
    %c0_16 = arith.constant 0 : index
    %20 = vector.load %arg8[%c0_15, %c0_16] : memref<32x32xbf16, #tpu.memory_space<vmem>>, vector<32x32xbf16>
    %cst_17 = arith.constant 0.000000e+00 : f32
    %21 = vector.broadcast %cst_17 : f32 to vector<8x32xf32>
    %22 = vector.extract_strided_slice %13 {offsets = [0, 0], sizes = [8, 8], strides = [1, 1]} : vector<8x32xbf16> to vector<8x8xbf16>
    %23 = vector.extract_strided_slice %19 {offsets = [0, 0], sizes = [8, 8], strides = [1, 1]} : vector<8x64xbf16> to vector<8x8xbf16>
    %24 = vector.extract_strided_slice %19 {offsets = [0, 32], sizes = [8, 8], strides = [1, 1]} : vector<8x64xbf16> to vector<8x8xbf16>
    %cst_18 = arith.constant dense<0.000000e+00> : vector<8x8xf32>
    %25 = tpu.matmul %22, %23, %cst_18 {dimension_numbers = #tpu.dot_dimension_numbers<[1], [1], [0], [0], [0, 0, 1, 0], [], []>} : vector<8x8xbf16>, vector<8x8xbf16>, vector<8x8xf32> -> vector<8x8xf32>
    %cst_19 = arith.constant dense<0xFF800000> : vector<8xf32>
    %26 = vector.multi_reduction <maximumf>, %25, %cst_19 [1] : vector<8x8xf32> to vector<8xf32>
    %27 = vector.shape_cast %26 : vector<8xf32> to vector<8x1xf32>
    %28 = vector.broadcast %27 : vector<8x1xf32> to vector<8x8xf32>
    %29 = arith.subf %25, %28 : vector<8x8xf32>
    %30 = math.exp %29 : vector<8x8xf32>
    %cst_20 = arith.constant dense<0.000000e+00> : vector<8xf32>
    %31 = vector.multi_reduction <add>, %30, %cst_20 [1] : vector<8x8xf32> to vector<8xf32>
    %32 = vector.shape_cast %31 : vector<8xf32> to vector<8x1xf32>
    %33 = tpu.reciprocal %32 {approx = true} : vector<8x1xf32> -> vector<8x1xf32>
    %34 = vector.broadcast %33 : vector<8x1xf32> to vector<8x8xf32>
    %35 = arith.mulf %30, %34 : vector<8x8xf32>
    %36 = arith.truncf %35 : vector<8x8xf32> to vector<8x8xbf16>
    %cst_21 = arith.constant dense<0.000000e+00> : vector<8x8xf32>
    %37 = tpu.matmul %36, %24, %cst_21 {dimension_numbers = #tpu.dot_dimension_numbers<[1], [0], [0], [1], [0, 0, 1, 1], [], []>} : vector<8x8xbf16>, vector<8x8xbf16>, vector<8x8xf32> -> vector<8x8xf32>
    %38 = arith.truncf %37 : vector<8x8xf32> to vector<8x8xbf16>
    %39 = vector.extract_strided_slice %20 {offsets = [0, 0], sizes = [8, 32], strides = [1, 1]} : vector<32x32xbf16> to vector<8x32xbf16>
    %cst_22 = arith.constant dense<0.000000e+00> : vector<8x32xf32>
    %40 = tpu.matmul %38, %39, %cst_22 {dimension_numbers = #tpu.dot_dimension_numbers<[1], [0], [0], [1], [0, 0, 1, 1], [], []>} : vector<8x8xbf16>, vector<8x32xbf16>, vector<8x32xf32> -> vector<8x32xf32>
    %41 = arith.addf %21, %40 : vector<8x32xf32>
    %42 = vector.extract_strided_slice %13 {offsets = [0, 8], sizes = [8, 8], strides = [1, 1]} : vector<8x32xbf16> to vector<8x8xbf16>
    %43 = vector.extract_strided_slice %19 {offsets = [0, 8], sizes = [8, 8], strides = [1, 1]} : vector<8x64xbf16> to vector<8x8xbf16>
    %44 = vector.extract_strided_slice %19 {offsets = [0, 40], sizes = [8, 8], strides = [1, 1]} : vector<8x64xbf16> to vector<8x8xbf16>
    %cst_23 = arith.constant dense<0.000000e+00> : vector<8x8xf32>
    %45 = tpu.matmul %42, %43, %cst_23 {dimension_numbers = #tpu.dot_dimension_numbers<[1], [1], [0], [0], [0, 0, 1, 0], [], []>} : vector<8x8xbf16>, vector<8x8xbf16>, vector<8x8xf32> -> vector<8x8xf32>
    %cst_24 = arith.constant dense<0xFF800000> : vector<8xf32>
    %46 = vector.multi_reduction <maximumf>, %45, %cst_24 [1] : vector<8x8xf32> to vector<8xf32>
    %47 = vector.shape_cast %46 : vector<8xf32> to vector<8x1xf32>
    %48 = vector.broadcast %47 : vector<8x1xf32> to vector<8x8xf32>
    %49 = arith.subf %45, %48 : vector<8x8xf32>
    %50 = math.exp %49 : vector<8x8xf32>
    %cst_25 = arith.constant dense<0.000000e+00> : vector<8xf32>
    %51 = vector.multi_reduction <add>, %50, %cst_25 [1] : vector<8x8xf32> to vector<8xf32>
    %52 = vector.shape_cast %51 : vector<8xf32> to vector<8x1xf32>
    %53 = tpu.reciprocal %52 {approx = true} : vector<8x1xf32> -> vector<8x1xf32>
    %54 = vector.broadcast %53 : vector<8x1xf32> to vector<8x8xf32>
    %55 = arith.mulf %50, %54 : vector<8x8xf32>
    %56 = arith.truncf %55 : vector<8x8xf32> to vector<8x8xbf16>
    %cst_26 = arith.constant dense<0.000000e+00> : vector<8x8xf32>
    %57 = tpu.matmul %56, %44, %cst_26 {dimension_numbers = #tpu.dot_dimension_numbers<[1], [0], [0], [1], [0, 0, 1, 1], [], []>} : vector<8x8xbf16>, vector<8x8xbf16>, vector<8x8xf32> -> vector<8x8xf32>
    %58 = arith.truncf %57 : vector<8x8xf32> to vector<8x8xbf16>
    %59 = vector.extract_strided_slice %20 {offsets = [8, 0], sizes = [8, 32], strides = [1, 1]} : vector<32x32xbf16> to vector<8x32xbf16>
    %cst_27 = arith.constant dense<0.000000e+00> : vector<8x32xf32>
    %60 = tpu.matmul %58, %59, %cst_27 {dimension_numbers = #tpu.dot_dimension_numbers<[1], [0], [0], [1], [0, 0, 1, 1], [], []>} : vector<8x8xbf16>, vector<8x32xbf16>, vector<8x32xf32> -> vector<8x32xf32>
    %61 = arith.addf %41, %60 : vector<8x32xf32>
    %62 = vector.extract_strided_slice %13 {offsets = [0, 16], sizes = [8, 8], strides = [1, 1]} : vector<8x32xbf16> to vector<8x8xbf16>
    %63 = vector.extract_strided_slice %19 {offsets = [0, 16], sizes = [8, 8], strides = [1, 1]} : vector<8x64xbf16> to vector<8x8xbf16>
    %64 = vector.extract_strided_slice %19 {offsets = [0, 48], sizes = [8, 8], strides = [1, 1]} : vector<8x64xbf16> to vector<8x8xbf16>
    %cst_28 = arith.constant dense<0.000000e+00> : vector<8x8xf32>
    %65 = tpu.matmul %62, %63, %cst_28 {dimension_numbers = #tpu.dot_dimension_numbers<[1], [1], [0], [0], [0, 0, 1, 0], [], []>} : vector<8x8xbf16>, vector<8x8xbf16>, vector<8x8xf32> -> vector<8x8xf32>
    %cst_29 = arith.constant dense<0xFF800000> : vector<8xf32>
    %66 = vector.multi_reduction <maximumf>, %65, %cst_29 [1] : vector<8x8xf32> to vector<8xf32>
    %67 = vector.shape_cast %66 : vector<8xf32> to vector<8x1xf32>
    %68 = vector.broadcast %67 : vector<8x1xf32> to vector<8x8xf32>
    %69 = arith.subf %65, %68 : vector<8x8xf32>
    %70 = math.exp %69 : vector<8x8xf32>
    %cst_30 = arith.constant dense<0.000000e+00> : vector<8xf32>
    %71 = vector.multi_reduction <add>, %70, %cst_30 [1] : vector<8x8xf32> to vector<8xf32>
    %72 = vector.shape_cast %71 : vector<8xf32> to vector<8x1xf32>
    %73 = tpu.reciprocal %72 {approx = true} : vector<8x1xf32> -> vector<8x1xf32>
    %74 = vector.broadcast %73 : vector<8x1xf32> to vector<8x8xf32>
    %75 = arith.mulf %70, %74 : vector<8x8xf32>
    %76 = arith.truncf %75 : vector<8x8xf32> to vector<8x8xbf16>
    %cst_31 = arith.constant dense<0.000000e+00> : vector<8x8xf32>
    %77 = tpu.matmul %76, %64, %cst_31 {dimension_numbers = #tpu.dot_dimension_numbers<[1], [0], [0], [1], [0, 0, 1, 1], [], []>} : vector<8x8xbf16>, vector<8x8xbf16>, vector<8x8xf32> -> vector<8x8xf32>
    %78 = arith.truncf %77 : vector<8x8xf32> to vector<8x8xbf16>
    %79 = vector.extract_strided_slice %20 {offsets = [16, 0], sizes = [8, 32], strides = [1, 1]} : vector<32x32xbf16> to vector<8x32xbf16>
    %cst_32 = arith.constant dense<0.000000e+00> : vector<8x32xf32>
    %80 = tpu.matmul %78, %79, %cst_32 {dimension_numbers = #tpu.dot_dimension_numbers<[1], [0], [0], [1], [0, 0, 1, 1], [], []>} : vector<8x8xbf16>, vector<8x32xbf16>, vector<8x32xf32> -> vector<8x32xf32>
    %81 = arith.addf %61, %80 : vector<8x32xf32>
    %82 = vector.extract_strided_slice %13 {offsets = [0, 24], sizes = [8, 8], strides = [1, 1]} : vector<8x32xbf16> to vector<8x8xbf16>
    %83 = vector.extract_strided_slice %19 {offsets = [0, 24], sizes = [8, 8], strides = [1, 1]} : vector<8x64xbf16> to vector<8x8xbf16>
    %84 = vector.extract_strided_slice %19 {offsets = [0, 56], sizes = [8, 8], strides = [1, 1]} : vector<8x64xbf16> to vector<8x8xbf16>
    %cst_33 = arith.constant dense<0.000000e+00> : vector<8x8xf32>
    %85 = tpu.matmul %82, %83, %cst_33 {dimension_numbers = #tpu.dot_dimension_numbers<[1], [1], [0], [0], [0, 0, 1, 0], [], []>} : vector<8x8xbf16>, vector<8x8xbf16>, vector<8x8xf32> -> vector<8x8xf32>
    %cst_34 = arith.constant dense<0xFF800000> : vector<8xf32>
    %86 = vector.multi_reduction <maximumf>, %85, %cst_34 [1] : vector<8x8xf32> to vector<8xf32>
    %87 = vector.shape_cast %86 : vector<8xf32> to vector<8x1xf32>
    %88 = vector.broadcast %87 : vector<8x1xf32> to vector<8x8xf32>
    %89 = arith.subf %85, %88 : vector<8x8xf32>
    %90 = math.exp %89 : vector<8x8xf32>
    %cst_35 = arith.constant dense<0.000000e+00> : vector<8xf32>
    %91 = vector.multi_reduction <add>, %90, %cst_35 [1] : vector<8x8xf32> to vector<8xf32>
    %92 = vector.shape_cast %91 : vector<8xf32> to vector<8x1xf32>
    %93 = tpu.reciprocal %92 {approx = true} : vector<8x1xf32> -> vector<8x1xf32>
    %94 = vector.broadcast %93 : vector<8x1xf32> to vector<8x8xf32>
    %95 = arith.mulf %90, %94 : vector<8x8xf32>
    %96 = arith.truncf %95 : vector<8x8xf32> to vector<8x8xbf16>
    %cst_36 = arith.constant dense<0.000000e+00> : vector<8x8xf32>
    %97 = tpu.matmul %96, %84, %cst_36 {dimension_numbers = #tpu.dot_dimension_numbers<[1], [0], [0], [1], [0, 0, 1, 1], [], []>} : vector<8x8xbf16>, vector<8x8xbf16>, vector<8x8xf32> -> vector<8x8xf32>
    %98 = arith.truncf %97 : vector<8x8xf32> to vector<8x8xbf16>
    %99 = vector.extract_strided_slice %20 {offsets = [24, 0], sizes = [8, 32], strides = [1, 1]} : vector<32x32xbf16> to vector<8x32xbf16>
    %cst_37 = arith.constant dense<0.000000e+00> : vector<8x32xf32>
    %100 = tpu.matmul %98, %99, %cst_37 {dimension_numbers = #tpu.dot_dimension_numbers<[1], [0], [0], [1], [0, 0, 1, 1], [], []>} : vector<8x8xbf16>, vector<8x32xbf16>, vector<8x32xf32> -> vector<8x32xf32>
    %101 = arith.addf %81, %100 : vector<8x32xf32>
    %c0_38 = arith.constant 0 : index
    %c0_39 = arith.constant 0 : index
    %102 = vector.load %arg9[%c0_38, %c0_39] : memref<1x32xf32, #tpu.memory_space<vmem>>, vector<1x32xf32>
    %103 = vector.broadcast %102 : vector<1x32xf32> to vector<8x32xf32>
    %104 = arith.addf %101, %103 : vector<8x32xf32>
    %105 = arith.addf %1, %104 : vector<8x32xf32>
    %c0_40 = arith.constant 0 : index
    %c0_41 = arith.constant 0 : index
    %106 = vector.load %arg10[%c0_40, %c0_41] : memref<1x32xf32, #tpu.memory_space<vmem>>, vector<1x32xf32>
    %c0_42 = arith.constant 0 : index
    %c0_43 = arith.constant 0 : index
    %107 = vector.load %arg11[%c0_42, %c0_43] : memref<1x32xf32, #tpu.memory_space<vmem>>, vector<1x32xf32>
    %cst_44 = arith.constant dense<0.000000e+00> : vector<8xf32>
    %108 = vector.multi_reduction <add>, %105, %cst_44 [1] : vector<8x32xf32> to vector<8xf32>
    %109 = vector.shape_cast %108 : vector<8xf32> to vector<8x1xf32>
    %cst_45 = arith.constant 3.200000e+01 : f32
    %110 = vector.broadcast %cst_45 : f32 to vector<8x1xf32>
    %111 = arith.divf %109, %110 : vector<8x1xf32>
    %112 = vector.broadcast %111 : vector<8x1xf32> to vector<8x32xf32>
    %113 = arith.subf %105, %112 : vector<8x32xf32>
    %114 = arith.mulf %113, %113 : vector<8x32xf32>
    %cst_46 = arith.constant dense<0.000000e+00> : vector<8xf32>
    %115 = vector.multi_reduction <add>, %114, %cst_46 [1] : vector<8x32xf32> to vector<8xf32>
    %116 = vector.shape_cast %115 : vector<8xf32> to vector<8x1xf32>
    %cst_47 = arith.constant 3.200000e+01 : f32
    %117 = vector.broadcast %cst_47 : f32 to vector<8x1xf32>
    %118 = arith.divf %116, %117 : vector<8x1xf32>
    %119 = vector.broadcast %111 : vector<8x1xf32> to vector<8x32xf32>
    %120 = arith.subf %105, %119 : vector<8x32xf32>
    %cst_48 = arith.constant 9.99999974E-6 : f32
    %121 = vector.broadcast %cst_48 : f32 to vector<8x1xf32>
    %122 = arith.addf %118, %121 : vector<8x1xf32>
    %123 = math.rsqrt %122 : vector<8x1xf32>
    %124 = vector.broadcast %123 : vector<8x1xf32> to vector<8x32xf32>
    %125 = arith.mulf %120, %124 : vector<8x32xf32>
    %126 = vector.broadcast %106 : vector<1x32xf32> to vector<8x32xf32>
    %127 = arith.mulf %125, %126 : vector<8x32xf32>
    %128 = vector.broadcast %107 : vector<1x32xf32> to vector<8x32xf32>
    %129 = arith.addf %127, %128 : vector<8x32xf32>
    %130 = arith.truncf %129 : vector<8x32xf32> to vector<8x32xbf16>
    %c0_49 = arith.constant 0 : index
    %c0_50 = arith.constant 0 : index
    %131 = vector.load %arg12[%c0_49, %c0_50] : memref<32x64xbf16, #tpu.memory_space<vmem>>, vector<32x64xbf16>
    %cst_51 = arith.constant dense<0.000000e+00> : vector<8x64xf32>
    %132 = tpu.matmul %130, %131, %cst_51 {dimension_numbers = #tpu.dot_dimension_numbers<[1], [0], [0], [1], [0, 0, 1, 1], [], []>} : vector<8x32xbf16>, vector<32x64xbf16>, vector<8x64xf32> -> vector<8x64xf32>
    %c0_52 = arith.constant 0 : index
    %c0_53 = arith.constant 0 : index
    %133 = vector.load %arg13[%c0_52, %c0_53] : memref<1x64xf32, #tpu.memory_space<vmem>>, vector<1x64xf32>
    %134 = vector.broadcast %133 : vector<1x64xf32> to vector<8x64xf32>
    %135 = arith.addf %132, %134 : vector<8x64xf32>
    %cst_54 = arith.constant 0.000000e+00 : f32
    %136 = vector.broadcast %cst_54 : f32 to vector<8x64xf32>
    %137 = arith.maximumf %135, %136 : vector<8x64xf32>
    %138 = arith.truncf %137 : vector<8x64xf32> to vector<8x64xbf16>
    %c0_55 = arith.constant 0 : index
    %c0_56 = arith.constant 0 : index
    %139 = vector.load %arg14[%c0_55, %c0_56] : memref<64x32xbf16, #tpu.memory_space<vmem>>, vector<64x32xbf16>
    %cst_57 = arith.constant dense<0.000000e+00> : vector<8x32xf32>
    %140 = tpu.matmul %138, %139, %cst_57 {dimension_numbers = #tpu.dot_dimension_numbers<[1], [0], [0], [1], [0, 0, 1, 1], [], []>} : vector<8x64xbf16>, vector<64x32xbf16>, vector<8x32xf32> -> vector<8x32xf32>
    %c0_58 = arith.constant 0 : index
    %c0_59 = arith.constant 0 : index
    %141 = vector.load %arg15[%c0_58, %c0_59] : memref<1x32xf32, #tpu.memory_space<vmem>>, vector<1x32xf32>
    %142 = vector.broadcast %141 : vector<1x32xf32> to vector<8x32xf32>
    %143 = arith.addf %140, %142 : vector<8x32xf32>
    %144 = arith.addf %129, %143 : vector<8x32xf32>
    %c0_60 = arith.constant 0 : index
    %c0_61 = arith.constant 0 : index
    %145 = vector.load %arg16[%c0_60, %c0_61] : memref<1x32xf32, #tpu.memory_space<vmem>>, vector<1x32xf32>
    %c0_62 = arith.constant 0 : index
    %c0_63 = arith.constant 0 : index
    %146 = vector.load %arg17[%c0_62, %c0_63] : memref<1x32xf32, #tpu.memory_space<vmem>>, vector<1x32xf32>
    %cst_64 = arith.constant dense<0.000000e+00> : vector<8xf32>
    %147 = vector.multi_reduction <add>, %144, %cst_64 [1] : vector<8x32xf32> to vector<8xf32>
    %148 = vector.shape_cast %147 : vector<8xf32> to vector<8x1xf32>
    %cst_65 = arith.constant 3.200000e+01 : f32
    %149 = vector.broadcast %cst_65 : f32 to vector<8x1xf32>
    %150 = arith.divf %148, %149 : vector<8x1xf32>
    %151 = vector.broadcast %150 : vector<8x1xf32> to vector<8x32xf32>
    %152 = arith.subf %144, %151 : vector<8x32xf32>
    %153 = arith.mulf %152, %152 : vector<8x32xf32>
    %cst_66 = arith.constant dense<0.000000e+00> : vector<8xf32>
    %154 = vector.multi_reduction <add>, %153, %cst_66 [1] : vector<8x32xf32> to vector<8xf32>
    %155 = vector.shape_cast %154 : vector<8xf32> to vector<8x1xf32>
    %cst_67 = arith.constant 3.200000e+01 : f32
    %156 = vector.broadcast %cst_67 : f32 to vector<8x1xf32>
    %157 = arith.divf %155, %156 : vector<8x1xf32>
    %158 = vector.broadcast %150 : vector<8x1xf32> to vector<8x32xf32>
    %159 = arith.subf %144, %158 : vector<8x32xf32>
    %cst_68 = arith.constant 9.99999974E-6 : f32
    %160 = vector.broadcast %cst_68 : f32 to vector<8x1xf32>
    %161 = arith.addf %157, %160 : vector<8x1xf32>
    %162 = math.rsqrt %161 : vector<8x1xf32>
    %163 = vector.broadcast %162 : vector<8x1xf32> to vector<8x32xf32>
    %164 = arith.mulf %159, %163 : vector<8x32xf32>
    %165 = vector.broadcast %145 : vector<1x32xf32> to vector<8x32xf32>
    %166 = arith.mulf %164, %165 : vector<8x32xf32>
    %167 = vector.broadcast %146 : vector<1x32xf32> to vector<8x32xf32>
    %168 = arith.addf %166, %167 : vector<8x32xf32>
    %c0_69 = arith.constant 0 : index
    %c0_70 = arith.constant 0 : index
    %c0_71 = arith.constant 0 : index
    %169 = vector.load %arg18[%c0_69, %c0_70, %c0_71] : memref<1x8x32xf32, #tpu.memory_space<vmem>>, vector<1x8x32xf32>
    %170 = vector.shape_cast %169 : vector<1x8x32xf32> to vector<8x32xf32>
    %171 = vector.shape_cast %168 : vector<8x32xf32> to vector<1x8x32xf32>
    tpu.vector_store %arg18[%c0_69, %c0_70, %c0_71], %171 {strides = array<i32>} : memref<1x8x32xf32, #tpu.memory_space<vmem>>, vector<1x8x32xf32>,
    return
  }
  func.func @transform_0(%arg0: i32, %arg1: i32) -> (i32, i32, i32) {
    %c0_i32 = arith.constant 0 : i32
    %c0_i32_0 = arith.constant 0 : i32
    return %arg0, %arg1, %c0_i32 : i32, i32, i32
  }
  func.func @transform_1(%arg0: i32, %arg1: i32) -> (i32, i32, i32) {
    %c0_i32 = arith.constant 0 : i32
    %c0_i32_0 = arith.constant 0 : i32
    %c0_i32_1 = arith.constant 0 : i32
    return %arg0, %c0_i32, %c0_i32_0 : i32, i32, i32
  }
  func.func @transform_2(%arg0: i32, %arg1: i32) -> (i32, i32) {
    %c0_i32 = arith.constant 0 : i32
    %c0_i32_0 = arith.constant 0 : i32
    %c0_i32_1 = arith.constant 0 : i32
    return %c0_i32, %c0_i32_0 : i32, i32
  }
  func.func @transform_3(%arg0: i32, %arg1: i32) -> (i32, i32) {
    %c0_i32 = arith.constant 0 : i32
    %c0_i32_0 = arith.constant 0 : i32
    %c0_i32_1 = arith.constant 0 : i32
    return %c0_i32, %c0_i32_0 : i32, i32
  }
  func.func @transform_4(%arg0: i32, %arg1: i32) -> (i32, i32) {
    %c0_i32 = arith.constant 0 : i32
    %c0_i32_0 = arith.constant 0 : i32
    %c0_i32_1 = arith.constant 0 : i32
    return %c0_i32, %c0_i32_0 : i32, i32
  }
  func.func @transform_5(%arg0: i32, %arg1: i32) -> (i32, i32) {
    %c0_i32 = arith.constant 0 : i32
    %c0_i32_0 = arith.constant 0 : i32
    %c0_i32_1 = arith.constant 0 : i32
    return %c0_i32, %c0_i32_0 : i32, i32
  }
  func.func @transform_6(%arg0: i32, %arg1: i32) -> (i32, i32) {
    %c0_i32 = arith.constant 0 : i32
    %c0_i32_0 = arith.constant 0 : i32
    %c0_i32_1 = arith.constant 0 : i32
    return %c0_i32, %c0_i32_0 : i32, i32
  }
  func.func @transform_7(%arg0: i32, %arg1: i32) -> (i32, i32) {
    %c0_i32 = arith.constant 0 : i32
    %c0_i32_0 = arith.constant 0 : i32
    %c0_i32_1 = arith.constant 0 : i32
    return %c0_i32, %c0_i32_0 : i32, i32
  }
  func.func @transform_8(%arg0: i32, %arg1: i32) -> (i32, i32) {
    %c0_i32 = arith.constant 0 : i32
    %c0_i32_0 = arith.constant 0 : i32
    %c0_i32_1 = arith.constant 0 : i32
    return %c0_i32, %c0_i32_0 : i32, i32
  }
  func.func @transform_9(%arg0: i32, %arg1: i32) -> (i32, i32) {
    %c0_i32 = arith.constant 0 : i32
    %c0_i32_0 = arith.constant 0 : i32
    %c0_i32_1 = arith.constant 0 : i32
    return %c0_i32, %c0_i32_0 : i32, i32
  }
  func.func @transform_10(%arg0: i32, %arg1: i32) -> (i32, i32) {
    %c0_i32 = arith.constant 0 : i32
    %c0_i32_0 = arith.constant 0 : i32
    %c0_i32_1 = arith.constant 0 : i32
    return %c0_i32, %c0_i32_0 : i32, i32
  }
  func.func @transform_11(%arg0: i32, %arg1: i32) -> (i32, i32) {
    %c0_i32 = arith.constant 0 : i32
    %c0_i32_0 = arith.constant 0 : i32
    %c0_i32_1 = arith.constant 0 : i32
    return %c0_i32, %c0_i32_0 : i32, i32
  }
  func.func @transform_12(%arg0: i32, %arg1: i32) -> (i32, i32) {
    %c0_i32 = arith.constant 0 : i32
    %c0_i32_0 = arith.constant 0 : i32
    %c0_i32_1 = arith.constant 0 : i32
    return %c0_i32, %c0_i32_0 : i32, i32
  }
  func.func @transform_13(%arg0: i32, %arg1: i32) -> (i32, i32) {
    %c0_i32 = arith.constant 0 : i32
    %c0_i32_0 = arith.constant 0 : i32
    %c0_i32_1 = arith.constant 0 : i32
    return %c0_i32, %c0_i32_0 : i32, i32
  }
  func.func @transform_14(%arg0: i32, %arg1: i32) -> (i32, i32) {
    %c0_i32 = arith.constant 0 : i32
    %c0_i32_0 = arith.constant 0 : i32
    %c0_i32_1 = arith.constant 0 : i32
    return %c0_i32, %c0_i32_0 : i32, i32
  }
  func.func @transform_15(%arg0: i32, %arg1: i32) -> (i32, i32) {
    %c0_i32 = arith.constant 0 : i32
    %c0_i32_0 = arith.constant 0 : i32
    %c0_i32_1 = arith.constant 0 : i32
    return %c0_i32, %c0_i32_0 : i32, i32
  }
  func.func @transform_16(%arg0: i32, %arg1: i32) -> (i32, i32, i32) {
    %c0_i32 = arith.constant 0 : i32
    %c0_i32_0 = arith.constant 0 : i32
    return %arg0, %arg1, %c0_i32 : i32, i32, i32
  }
}

</mosaic_0001>

<llo_original>
// kernel: tpu_custom_call.1
$region0: #{tpu_custom_call.1}
  #allocation0 [shape = 'u32[]', space=smem, size = 0x4, offset = 0x4, fixed_abs, tag = 'smem constant byte address 0x4 - core index']
  #allocation1 [shape = 'u32[144,128]{1,0:T(1,128)}', space=vmem, size = 0x12000, scoped, tag = 'internal scratch']
  %s0 = inlined_call_operand.vmem [shape: f32[2,8,32], index: 0, kind: input, shape index: {}]
  %s1 = inlined_call_operand.vmem [shape: f32[2,8,32], index: 1, kind: input, shape index: {}]
  %s2 = inlined_call_operand.vmem [shape: bf16[32,32], index: 2, kind: input, shape index: {}]
  %s3 = inlined_call_operand.vmem [shape: f32[1,32], index: 3, kind: input, shape index: {}]
  %s4 = inlined_call_operand.hbm [shape: bf16[32,64], index: 4, kind: input, shape index: {}]
  %s5 = inlined_call_operand.vmem [shape: f32[1,64], index: 5, kind: input, shape index: {}]
  %s6 = inlined_call_operand.hbm [shape: bf16[32,32], index: 6, kind: input, shape index: {}]
  %s7 = inlined_call_operand.hbm [shape: f32[1,32], index: 7, kind: input, shape index: {}]
  %s8 = inlined_call_operand.hbm [shape: f32[1,32], index: 8, kind: input, shape index: {}]
  %s9 = inlined_call_operand.hbm [shape: f32[1,32], index: 9, kind: input, shape index: {}]
  %s10 = inlined_call_operand.vmem [shape: bf16[32,64], index: 10, kind: input, shape index: {}]
  %s11 = inlined_call_operand.vmem [shape: f32[1,64], index: 11, kind: input, shape index: {}]
  %s12 = inlined_call_operand.vmem [shape: bf16[64,32], index: 12, kind: input, shape index: {}]
  %s13 = inlined_call_operand.vmem [shape: f32[1,32], index: 13, kind: input, shape index: {}]
  %s14 = inlined_call_operand.vmem [shape: f32[1,32], index: 14, kind: input, shape index: {}]
  %s15 = inlined_call_operand.vmem [shape: f32[1,32], index: 15, kind: input, shape index: {}]
  %s16 = inlined_call_operand.hbm [shape: f32[2,8,32], index: 16, kind: output, shape index: {}]
  %s17 = sld [smem:[#allocation0]]
  $region117: #{tpu_custom_call.1} parent=0
    _
  %s19 = ssub.s32 1, %s17
  %s20 = scalar_select 0, %s19, %s17
  $region1: #{tpu_custom_call.1} parent=0
    #allocation2 [shape = 'u8[8192]{0}', space=vmem, size = 0x2000, scoped, tag = 'input window, operand 4, single buffered']
    #allocation3 [shape = 's32[2]{0}', space=sflag, size = 0x8, scoped, tag = 'scoped memory for tpu_custom_call.1']
    #allocation4 [shape = 's32[2]{0}', space=sflag, size = 0x8, scoped, tag = 'scoped memory for tpu_custom_call.1']
    #allocation5 [shape = 'u8[8192]{0}', space=vmem, size = 0x2000, scoped, tag = 'input window, operand 6, single buffered']
    #allocation6 [shape = 's32[1]{0}', space=sflag, size = 0x4, scoped, tag = 'scoped memory for tpu_custom_call.1']
    #allocation7 [shape = 'u8[512]{0}', space=vmem, size = 0x400, scoped, tag = 'input window, operand 7, single buffered']
    #allocation8 [shape = 'u8[512]{0}', space=vmem, size = 0x400, scoped, tag = 'input window, operand 8, single buffered']
    #allocation9 [shape = 's32[1]{0}', space=sflag, size = 0x4, scoped, tag = 'scoped memory for tpu_custom_call.1']
    #allocation10 [shape = 'u8[512]{0}', space=vmem, size = 0x400, scoped, tag = 'input window, operand 9, single buffered']
    #allocation11 [shape = 'u8[8192]{0}', space=vmem, size = 0x2000, scoped, tag = 'output window, operand 0']
    %21 = vsyncpa [#allocation3], 0
    %22 = vsyncpa [#allocation6], 0
    %23 = vsyncpa [#allocation9], 0
    %24 = vsyncpa [#allocation4], 0
    %s25 = scalar_lea.sflag [#allocation4], 1
    %26 = vsyncpa %s25, 0
    loop: start=0, step=1, limit=4
    $region2: #{tpu_custom_call.1} parent=1 // loop_pre_header
      _
    $region3: #{tpu_custom_call.1} parent=1 // loop_header
      %s28 = sphi 0, %s32
      %p29 = scmp.ge.s32.totalorder %s28, 4
      %s35 = sphi 0, %s47
      %s36 = sphi 0, %s43
      %s37 = sphi 0, %s35
      %s38 = sphi 0, %s36
      %s39 = sphi 0, %s37
      %s40 = sphi 0, %s38
      %s52 = sphi 0, %s54
      %s55 = sphi 0, %s52
      %s56 = sphi 0, %s55
      %s72 = sphi 0, %s56
      %s78 = sphi 0, %s80
      %s81 = sphi 0, %s78
      %s82 = sphi 0, %s81
      %s98 = sphi 0, %s82
      %s102 = sphi 0, %s102
      %s104 = sphi 0, %s102
      %s105 = sphi 0, %s104
      %s119 = sphi 0, %s105
      %s123 = sphi 0, %s123
      %s125 = sphi 0, %s123
      %s126 = sphi 0, %s125
      %s140 = sphi 0, %s126
      %s144 = sphi 0, %s144
      %s146 = sphi 0, %s144
      %s147 = sphi 0, %s146
      %s161 = sphi 0, %s147
      %s165 = sphi 0, %s165
      %s167 = sphi 0, %s165
      %s168 = sphi 0, %s167
      %s182 = sphi 0, %s168
      %s186 = sphi 0, %s186
      %s188 = sphi 0, %s186
      %s189 = sphi 0, %s188
      %s203 = sphi 0, %s189
      %s207 = sphi 0, %s207
      %s209 = sphi 0, %s207
      %s210 = sphi 0, %s209
      %s224 = sphi 0, %s210
      %s228 = sphi 0, %s228
      %s230 = sphi 0, %s228
      %s231 = sphi 0, %s230
      %s245 = sphi 0, %s231
      %s249 = sphi 0, %s249
      %s251 = sphi 0, %s249
      %s252 = sphi 0, %s251
      %s266 = sphi 0, %s252
      %s270 = sphi 0, %s270
      %s272 = sphi 0, %s270
      %s273 = sphi 0, %s272
      %s287 = sphi 0, %s273
      %s291 = sphi 0, %s291
      %s293 = sphi 0, %s291
      %s294 = sphi 0, %s293
      %s308 = sphi 0, %s294
      %s312 = sphi 0, %s312
      %s314 = sphi 0, %s312
      %s315 = sphi 0, %s314
      %s329 = sphi 0, %s315
      %s333 = sphi 0, %s333
      %s335 = sphi 0, %s333
      %s336 = sphi 0, %s335
      %s350 = sphi 0, %s336
      %s354 = sphi 0, %s354
      %s356 = sphi 0, %s354
      %s357 = sphi 0, %s356
      %s371 = sphi 0, %s357
      %s375 = sphi 0, %s375
      %s377 = sphi 0, %s375
      %s378 = sphi 0, %s377
      %s392 = sphi 0, %s378
      %s400 = sphi 0, %s402
      %s403 = sphi 0, %s400
      %s404 = sphi 0, %s403
      %s420 = sphi 0, %s404
    $region4: #{tpu_custom_call.1} parent=1 // loop_header_branch
      %31 = sbr.rel (%p29) target = $region8
    $region5: #{tpu_custom_call.1} parent=1 // loop_body
      %s33 = ssub.s32 %s28, 1
      %s34 = ssub.s32 %s28, 2
      %s41 = sadd.s32 1, %s36
      %p42 = scmp.ge.s32.totalorder %s41, 1
      %s43 = scalar_select %p42, 0, %s41
      %s44 = sadd.s32 1, %s35
      %s45 = scalar_select %p42, %s44, %s35
      %p46 = scmp.ge.s32.totalorder %s45, 2
      %s47 = scalar_select %p46, 0, %s45
      %s48 = ssub.s32 %s35, %s47
      %s49 = ssub.s32 %s36, %s43
      %s50 = sor.u32 %s48, %s49
      %p51 = scmp.eq.s32.totalorder %s50, 0
      %s53 = sadd.s32 %s52, 1
      %s54 = scalar_select %p51, %s52, %s53
      %p57 = pneg %p51
      %p58 = scmp.eq.s32.totalorder %s28, 1
      %p59 = por %p57, %p58
      %p60 = scmp.ne.s32.totalorder %s52, %s55
      %p61 = scmp.eq.s32.totalorder %s28, 0
      %p62 = por %p60, %p61
      %p63 = scmp.ne.s32.totalorder %s52, %s55
      %p64 = scmp.eq.s32.totalorder %s33, 1
      %p65 = por %p63, %p64
      %p66 = scmp.ne.s32.totalorder %s55, %s56
      %p67 = scmp.eq.s32.totalorder %s33, 0
      %p68 = por %p66, %p67
      %p69 = scmp.ne.s32.totalorder %s55, %s56
      %p70 = scmp.eq.s32.totalorder %s34, 1
      %p71 = por %p69, %p70
      %p73 = scmp.ne.s32.totalorder %s56, %s72
      %p74 = scmp.eq.s32.totalorder %s34, 0
      %p75 = por %p73, %p74
      %s76 = ssub.s32 %s35, %s47
      %p77 = scmp.eq.s32.totalorder %s76, 0
      %s79 = sadd.s32 %s78, 1
      %s80 = scalar_select %p77, %s78, %s79
      %p83 = pneg %p77
      %p84 = scmp.eq.s32.totalorder %s28, 1
      %p85 = por %p83, %p84
      %p86 = scmp.ne.s32.totalorder %s78, %s81
      %p87 = scmp.eq.s32.totalorder %s28, 0
      %p88 = por %p86, %p87
      %p89 = scmp.ne.s32.totalorder %s78, %s81
      %p90 = scmp.eq.s32.totalorder %s33, 1
      %p91 = por %p89, %p90
      %p92 = scmp.ne.s32.totalorder %s81, %s82
      %p93 = scmp.eq.s32.totalorder %s33, 0
      %p94 = por %p92, %p93
      %p95 = scmp.ne.s32.totalorder %s81, %s82
      %p96 = scmp.eq.s32.totalorder %s34, 1
      %p97 = por %p95, %p96
      %p99 = scmp.ne.s32.totalorder %s82, %s98
      %p100 = scmp.eq.s32.totalorder %s34, 0
      %p101 = por %p99, %p100
      %s103 = sadd.s32 %s102, 1
      %p106 = scmp.eq.s32.totalorder %s28, 1
      %p107 = scmp.ne.s32.totalorder %s102, %s104
      %p108 = scmp.eq.s32.totalorder %s28, 0
      %p109 = por %p107, %p108
      %p110 = scmp.ne.s32.totalorder %s102, %s104
      %p111 = scmp.eq.s32.totalorder %s33, 1
      %p112 = por %p110, %p111
      %p113 = scmp.ne.s32.totalorder %s104, %s105
      %p114 = scmp.eq.s32.totalorder %s33, 0
      %p115 = por %p113, %p114
      %p116 = scmp.ne.s32.totalorder %s104, %s105
      %p117 = scmp.eq.s32.totalorder %s34, 1
      %p118 = por %p116, %p117
      %p120 = scmp.ne.s32.totalorder %s105, %s119
      %p121 = scmp.eq.s32.totalorder %s34, 0
      %p122 = por %p120, %p121
      %s124 = sadd.s32 %s123, 1
      %p127 = scmp.eq.s32.totalorder %s28, 1
      %p128 = scmp.ne.s32.totalorder %s123, %s125
      %p129 = scmp.eq.s32.totalorder %s28, 0
      %p130 = por %p128, %p129
      %p131 = scmp.ne.s32.totalorder %s123, %s125
      %p132 = scmp.eq.s32.totalorder %s33, 1
      %p133 = por %p131, %p132
      %p134 = scmp.ne.s32.totalorder %s125, %s126
      %p135 = scmp.eq.s32.totalorder %s33, 0
      %p136 = por %p134, %p135
      %p137 = scmp.ne.s32.totalorder %s125, %s126
      %p138 = scmp.eq.s32.totalorder %s34, 1
      %p139 = por %p137, %p138
      %p141 = scmp.ne.s32.totalorder %s126, %s140
      %p142 = scmp.eq.s32.totalorder %s34, 0
      %p143 = por %p141, %p142
      %s145 = sadd.s32 %s144, 1
      %p148 = scmp.eq.s32.totalorder %s28, 1
      %p149 = scmp.ne.s32.totalorder %s144, %s146
      %p150 = scmp.eq.s32.totalorder %s28, 0
      %p151 = por %p149, %p150
      %p152 = scmp.ne.s32.totalorder %s144, %s146
      %p153 = scmp.eq.s32.totalorder %s33, 1
      %p154 = por %p152, %p153
      %p155 = scmp.ne.s32.totalorder %s146, %s147
      %p156 = scmp.eq.s32.totalorder %s33, 0
      %p157 = por %p155, %p156
      %p158 = scmp.ne.s32.totalorder %s146, %s147
      %p159 = scmp.eq.s32.totalorder %s34, 1
      %p160 = por %p158, %p159
      %p162 = scmp.ne.s32.totalorder %s147, %s161
      %p163 = scmp.eq.s32.totalorder %s34, 0
      %p164 = por %p162, %p163
      %s166 = sadd.s32 %s165, 1
      %p169 = scmp.eq.s32.totalorder %s28, 1
      %p170 = scmp.ne.s32.totalorder %s165, %s167
      %p171 = scmp.eq.s32.totalorder %s28, 0
      %p172 = por %p170, %p171
      %p173 = scmp.ne.s32.totalorder %s165, %s167
      %p174 = scmp.eq.s32.totalorder %s33, 1
      %p175 = por %p173, %p174
      %p176 = scmp.ne.s32.totalorder %s167, %s168
      %p177 = scmp.eq.s32.totalorder %s33, 0
      %p178 = por %p176, %p177
      %p179 = scmp.ne.s32.totalorder %s167, %s168
      %p180 = scmp.eq.s32.totalorder %s34, 1
      %p181 = por %p179, %p180
      %p183 = scmp.ne.s32.totalorder %s168, %s182
      %p184 = scmp.eq.s32.totalorder %s34, 0
      %p185 = por %p183, %p184
      %s187 = sadd.s32 %s186, 1
      %p190 = scmp.eq.s32.totalorder %s28, 1
      %p191 = scmp.ne.s32.totalorder %s186, %s188
      %p192 = scmp.eq.s32.totalorder %s28, 0
      %p193 = por %p191, %p192
      %p194 = scmp.ne.s32.totalorder %s186, %s188
      %p195 = scmp.eq.s32.totalorder %s33, 1
      %p196 = por %p194, %p195
      %p197 = scmp.ne.s32.totalorder %s188, %s189
      %p198 = scmp.eq.s32.totalorder %s33, 0
      %p199 = por %p197, %p198
      %p200 = scmp.ne.s32.totalorder %s188, %s189
      %p201 = scmp.eq.s32.totalorder %s34, 1
      %p202 = por %p200, %p201
      %p204 = scmp.ne.s32.totalorder %s189, %s203
      %p205 = scmp.eq.s32.totalorder %s34, 0
      %p206 = por %p204, %p205
      %s208 = sadd.s32 %s207, 1
      %p211 = scmp.eq.s32.totalorder %s28, 1
      %p212 = scmp.ne.s32.totalorder %s207, %s209
      %p213 = scmp.eq.s32.totalorder %s28, 0
      %p214 = por %p212, %p213
      %p215 = scmp.ne.s32.totalorder %s207, %s209
      %p216 = scmp.eq.s32.totalorder %s33, 1
      %p217 = por %p215, %p216
      %p218 = scmp.ne.s32.totalorder %s209, %s210
      %p219 = scmp.eq.s32.totalorder %s33, 0
      %p220 = por %p218, %p219
      %p221 = scmp.ne.s32.totalorder %s209, %s210
      %p222 = scmp.eq.s32.totalorder %s34, 1
      %p223 = por %p221, %p222
      %p225 = scmp.ne.s32.totalorder %s210, %s224
      %p226 = scmp.eq.s32.totalorder %s34, 0
      %p227 = por %p225, %p226
      %s229 = sadd.s32 %s228, 1
      %p232 = scmp.eq.s32.totalorder %s28, 1
      %p233 = scmp.ne.s32.totalorder %s228, %s230
      %p234 = scmp.eq.s32.totalorder %s28, 0
      %p235 = por %p233, %p234
      %p236 = scmp.ne.s32.totalorder %s228, %s230
      %p237 = scmp.eq.s32.totalorder %s33, 1
      %p238 = por %p236, %p237
      %p239 = scmp.ne.s32.totalorder %s230, %s231
      %p240 = scmp.eq.s32.totalorder %s33, 0
      %p241 = por %p239, %p240
      %p242 = scmp.ne.s32.totalorder %s230, %s231
      %p243 = scmp.eq.s32.totalorder %s34, 1
      %p244 = por %p242, %p243
      %p246 = scmp.ne.s32.totalorder %s231, %s245
      %p247 = scmp.eq.s32.totalorder %s34, 0
      %p248 = por %p246, %p247
      %s250 = sadd.s32 %s249, 1
      %p253 = scmp.eq.s32.totalorder %s28, 1
      %p254 = scmp.ne.s32.totalorder %s249, %s251
      %p255 = scmp.eq.s32.totalorder %s28, 0
      %p256 = por %p254, %p255
      %p257 = scmp.ne.s32.totalorder %s249, %s251
      %p258 = scmp.eq.s32.totalorder %s33, 1
      %p259 = por %p257, %p258
      %p260 = scmp.ne.s32.totalorder %s251, %s252
      %p261 = scmp.eq.s32.totalorder %s33, 0
      %p262 = por %p260, %p261
      %p263 = scmp.ne.s32.totalorder %s251, %s252
      %p264 = scmp.eq.s32.totalorder %s34, 1
      %p265 = por %p263, %p264
      %p267 = scmp.ne.s32.totalorder %s252, %s266
      %p268 = scmp.eq.s32.totalorder %s34, 0
      %p269 = por %p267, %p268
      %s271 = sadd.s32 %s270, 1
      %p274 = scmp.eq.s32.totalorder %s28, 1
      %p275 = scmp.ne.s32.totalorder %s270, %s272
      %p276 = scmp.eq.s32.totalorder %s28, 0
      %p277 = por %p275, %p276
      %p278 = scmp.ne.s32.totalorder %s270, %s272
      %p279 = scmp.eq.s32.totalorder %s33, 1
      %p280 = por %p278, %p279
      %p281 = scmp.ne.s32.totalorder %s272, %s273
      %p282 = scmp.eq.s32.totalorder %s33, 0
      %p283 = por %p281, %p282
      %p284 = scmp.ne.s32.totalorder %s272, %s273
      %p285 = scmp.eq.s32.totalorder %s34, 1
      %p286 = por %p284, %p285
      %p288 = scmp.ne.s32.totalorder %s273, %s287
      %p289 = scmp.eq.s32.totalorder %s34, 0
      %p290 = por %p288, %p289
      %s292 = sadd.s32 %s291, 1
      %p295 = scmp.eq.s32.totalorder %s28, 1
      %p296 = scmp.ne.s32.totalorder %s291, %s293
      %p297 = scmp.eq.s32.totalorder %s28, 0
      %p298 = por %p296, %p297
      %p299 = scmp.ne.s32.totalorder %s291, %s293
      %p300 = scmp.eq.s32.totalorder %s33, 1
      %p301 = por %p299, %p300
      %p302 = scmp.ne.s32.totalorder %s293, %s294
      %p303 = scmp.eq.s32.totalorder %s33, 0
      %p304 = por %p302, %p303
      %p305 = scmp.ne.s32.totalorder %s293, %s294
      %p306 = scmp.eq.s32.totalorder %s34, 1
      %p307 = por %p305, %p306
      %p309 = scmp.ne.s32.totalorder %s294, %s308
      %p310 = scmp.eq.s32.totalorder %s34, 0
      %p311 = por %p309, %p310
      %s313 = sadd.s32 %s312, 1
      %p316 = scmp.eq.s32.totalorder %s28, 1
      %p317 = scmp.ne.s32.totalorder %s312, %s314
      %p318 = scmp.eq.s32.totalorder %s28, 0
      %p319 = por %p317, %p318
      %p320 = scmp.ne.s32.totalorder %s312, %s314
      %p321 = scmp.eq.s32.totalorder %s33, 1
      %p322 = por %p320, %p321
      %p323 = scmp.ne.s32.totalorder %s314, %s315
      %p324 = scmp.eq.s32.totalorder %s33, 0
      %p325 = por %p323, %p324
      %p326 = scmp.ne.s32.totalorder %s314, %s315
      %p327 = scmp.eq.s32.totalorder %s34, 1
      %p328 = por %p326, %p327
      %p330 = scmp.ne.s32.totalorder %s315, %s329
      %p331 = scmp.eq.s32.totalorder %s34, 0
      %p332 = por %p330, %p331
      %s334 = sadd.s32 %s333, 1
      %p337 = scmp.eq.s32.totalorder %s28, 1
      %p338 = scmp.ne.s32.totalorder %s333, %s335
      %p339 = scmp.eq.s32.totalorder %s28, 0
      %p340 = por %p338, %p339
      %p341 = scmp.ne.s32.totalorder %s333, %s335
      %p342 = scmp.eq.s32.totalorder %s33, 1
      %p343 = por %p341, %p342
      %p344 = scmp.ne.s32.totalorder %s335, %s336
      %p345 = scmp.eq.s32.totalorder %s33, 0
      %p346 = por %p344, %p345
      %p347 = scmp.ne.s32.totalorder %s335, %s336
      %p348 = scmp.eq.s32.totalorder %s34, 1
      %p349 = por %p347, %p348
      %p351 = scmp.ne.s32.totalorder %s336, %s350
      %p352 = scmp.eq.s32.totalorder %s34, 0
      %p353 = por %p351, %p352
      %s355 = sadd.s32 %s354, 1
      %p358 = scmp.eq.s32.totalorder %s28, 1
      %p359 = scmp.ne.s32.totalorder %s354, %s356
      %p360 = scmp.eq.s32.totalorder %s28, 0
      %p361 = por %p359, %p360
      %p362 = scmp.ne.s32.totalorder %s354, %s356
      %p363 = scmp.eq.s32.totalorder %s33, 1
      %p364 = por %p362, %p363
      %p365 = scmp.ne.s32.totalorder %s356, %s357
      %p366 = scmp.eq.s32.totalorder %s33, 0
      %p367 = por %p365, %p366
      %p368 = scmp.ne.s32.totalorder %s356, %s357
      %p369 = scmp.eq.s32.totalorder %s34, 1
      %p370 = por %p368, %p369
      %p372 = scmp.ne.s32.totalorder %s357, %s371
      %p373 = scmp.eq.s32.totalorder %s34, 0
      %p374 = por %p372, %p373
      %s376 = sadd.s32 %s375, 1
      %p379 = scmp.eq.s32.totalorder %s28, 1
      %p380 = scmp.ne.s32.totalorder %s375, %s377
      %p381 = scmp.eq.s32.totalorder %s28, 0
      %p382 = por %p380, %p381
      %p383 = scmp.ne.s32.totalorder %s375, %s377
      %p384 = scmp.eq.s32.totalorder %s33, 1
      %p385 = por %p383, %p384
      %p386 = scmp.ne.s32.totalorder %s377, %s378
      %p387 = scmp.eq.s32.totalorder %s33, 0
      %p388 = por %p386, %p387
      %p389 = scmp.ne.s32.totalorder %s377, %s378
      %p390 = scmp.eq.s32.totalorder %s34, 1
      %p391 = por %p389, %p390
      %p393 = scmp.ne.s32.totalorder %s378, %s392
      %p394 = scmp.eq.s32.totalorder %s34, 0
      %p395 = por %p393, %p394
      %s396 = ssub.s32 %s35, %s47
      %s397 = ssub.s32 %s36, %s43
      %s398 = sor.u32 %s396, %s397
      %p399 = scmp.eq.s32.totalorder %s398, 0
      %s401 = sadd.s32 %s400, 1
      %s402 = scalar_select %p399, %s400, %s401
      %p405 = pneg %p399
      %p406 = scmp.eq.s32.totalorder %s28, 1
      %p407 = por %p405, %p406
      %p408 = scmp.ne.s32.totalorder %s400, %s403
      %p409 = scmp.eq.s32.totalorder %s28, 0
      %p410 = por %p408, %p409
      %p411 = scmp.ne.s32.totalorder %s400, %s403
      %p412 = scmp.eq.s32.totalorder %s33, 1
      %p413 = por %p411, %p412
      %p414 = scmp.ne.s32.totalorder %s403, %s404
      %p415 = scmp.eq.s32.totalorder %s33, 0
      %p416 = por %p414, %p415
      %p417 = scmp.ne.s32.totalorder %s403, %s404
      %p418 = scmp.eq.s32.totalorder %s34, 1
      %p419 = por %p417, %p418
      %p421 = scmp.ne.s32.totalorder %s404, %s420
      %p422 = scmp.eq.s32.totalorder %s34, 0
      %p423 = por %p421, %p422
      %p424 = scmp.le.s32.totalorder 1, %s28
      %p425 = scmp.lt.s32.totalorder %s28, 3
      %p426 = pnand %p424, %p425
      %p427 = pneg %p426
      // Predicated region
      $region9: #{tpu_custom_call.1} parent=5 // pred_check
        _
      $region10: #{tpu_custom_call.1} parent=5 // pred_check_branch
        %429 = sbr.rel (%p426) target = $region12
      $region11: #{tpu_custom_call.1} parent=5 // pred_region
        %s430 = ssub.s32 %s28, 1
        // Predicated region
        $region13: #{tpu_custom_call.1} parent=11 // pred_check
          %p431 = pneg %p115
        $region14: #{tpu_custom_call.1} parent=11 // pred_check_branch
          %433 = sbr.rel (%p431) target = $region16
        $region15: #{tpu_custom_call.1} parent=11 // pred_region
          _
        $region16: #{tpu_custom_call.1} parent=11 // pred_fallthru
          _
        // Predicated region
        $region17: #{tpu_custom_call.1} parent=11 // pred_check
          %p434 = pneg %p136
        $region18: #{tpu_custom_call.1} parent=11 // pred_check_branch
          %436 = sbr.rel (%p434) target = $region20
        $region19: #{tpu_custom_call.1} parent=11 // pred_region
          _
        $region20: #{tpu_custom_call.1} parent=11 // pred_fallthru
          _
        // Predicated region
        $region21: #{tpu_custom_call.1} parent=11 // pred_check
          %p437 = pneg %p157
        $region22: #{tpu_custom_call.1} parent=11 // pred_check_branch
          %439 = sbr.rel (%p437) target = $region24
        $region23: #{tpu_custom_call.1} parent=11 // pred_region
          %s441 = ssub.s32 256, 256
          %442 = vsyncadd [#allocation3], %s441
          %s443 = sshll.u32 [#allocation2], 4
          %s444 = int_to_ptr.vmem [resolvable:$true] %s443
          %449 = dma.hbm_to_vmem [thread:$0]  %s4, 256, %s444, [#allocation3], 64, 64, 4
        $region24: #{tpu_custom_call.1} parent=11 // pred_fallthru
          _
        // Predicated region
        $region25: #{tpu_custom_call.1} parent=11 // pred_check
          %p450 = pneg %p178
        $region26: #{tpu_custom_call.1} parent=11 // pred_check_branch
          %452 = sbr.rel (%p450) target = $region28
        $region27: #{tpu_custom_call.1} parent=11 // pred_region
          _
        $region28: #{tpu_custom_call.1} parent=11 // pred_fallthru
          _
        // Predicated region
        $region29: #{tpu_custom_call.1} parent=11 // pred_check
          %p453 = pneg %p199
        $region30: #{tpu_custom_call.1} parent=11 // pred_check_branch
          %455 = sbr.rel (%p453) target = $region32
        $region31: #{tpu_custom_call.1} parent=11 // pred_region
          %s457 = ssub.s32 256, 256
          %458 = vsyncadd [#allocation6], %s457
          %s459 = sshll.u32 [#allocation5], 4
          %s460 = int_to_ptr.vmem [resolvable:$true] %s459
          %465 = dma.hbm_to_vmem [thread:$0]  %s6, 256, %s460, [#allocation6], 64, 64, 4
        $region32: #{tpu_custom_call.1} parent=11 // pred_fallthru
          _
        // Predicated region
        $region33: #{tpu_custom_call.1} parent=11 // pred_check
          %p466 = pneg %p220
        $region34: #{tpu_custom_call.1} parent=11 // pred_check_branch
          %468 = sbr.rel (%p466) target = $region36
        $region35: #{tpu_custom_call.1} parent=11 // pred_region
          %s470 = ssub.s32 16, 16
          %471 = vsyncadd [#allocation6], %s470
          %s473 = sshll.u32 [#allocation7], 4
          %s474 = int_to_ptr.vmem [resolvable:$true] %s473
          %476 = dma.hbm_to_vmem [thread:$0]  %s7, 16, %s474, [#allocation6]
        $region36: #{tpu_custom_call.1} parent=11 // pred_fallthru
          _
        // Predicated region
        $region37: #{tpu_custom_call.1} parent=11 // pred_check
          %p477 = pneg %p241
        $region38: #{tpu_custom_call.1} parent=11 // pred_check_branch
          %479 = sbr.rel (%p477) target = $region40
        $region39: #{tpu_custom_call.1} parent=11 // pred_region
          %s481 = ssub.s32 16, 16
          %482 = vsyncadd [#allocation9], %s481
          %s484 = sshll.u32 [#allocation8], 4
          %s485 = int_to_ptr.vmem [resolvable:$true] %s484
          %487 = dma.hbm_to_vmem [thread:$0]  %s8, 16, %s485, [#allocation9]
        $region40: #{tpu_custom_call.1} parent=11 // pred_fallthru
          _
        // Predicated region
        $region41: #{tpu_custom_call.1} parent=11 // pred_check
          %p488 = pneg %p262
        $region42: #{tpu_custom_call.1} parent=11 // pred_check_branch
          %490 = sbr.rel (%p488) target = $region44
        $region43: #{tpu_custom_call.1} parent=11 // pred_region
          %s492 = ssub.s32 16, 16
          %493 = vsyncadd [#allocation9], %s492
          %s495 = sshll.u32 [#allocation10], 4
          %s496 = int_to_ptr.vmem [resolvable:$true] %s495
          %498 = dma.hbm_to_vmem [thread:$0]  %s9, 16, %s496, [#allocation9]
        $region44: #{tpu_custom_call.1} parent=11 // pred_fallthru
          _
        // Predicated region
        $region45: #{tpu_custom_call.1} parent=11 // pred_check
          %p499 = pneg %p283
        $region46: #{tpu_custom_call.1} parent=11 // pred_check_branch
          %501 = sbr.rel (%p499) target = $region48
        $region47: #{tpu_custom_call.1} parent=11 // pred_region
          _
        $region48: #{tpu_custom_call.1} parent=11 // pred_fallthru
          _
        // Predicated region
        $region49: #{tpu_custom_call.1} parent=11 // pred_check
          %p502 = pneg %p304
        $region50: #{tpu_custom_call.1} parent=11 // pred_check_branch
          %504 = sbr.rel (%p502) target = $region52
        $region51: #{tpu_custom_call.1} parent=11 // pred_region
          _
        $region52: #{tpu_custom_call.1} parent=11 // pred_fallthru
          _
        // Predicated region
        $region53: #{tpu_custom_call.1} parent=11 // pred_check
          %p505 = pneg %p325
        $region54: #{tpu_custom_call.1} parent=11 // pred_check_branch
          %507 = sbr.rel (%p505) target = $region56
        $region55: #{tpu_custom_call.1} parent=11 // pred_region
          _
        $region56: #{tpu_custom_call.1} parent=11 // pred_fallthru
          _
        // Predicated region
        $region57: #{tpu_custom_call.1} parent=11 // pred_check
          %p508 = pneg %p346
        $region58: #{tpu_custom_call.1} parent=11 // pred_check_branch
          %510 = sbr.rel (%p508) target = $region60
        $region59: #{tpu_custom_call.1} parent=11 // pred_region
          _
        $region60: #{tpu_custom_call.1} parent=11 // pred_fallthru
          _
        // Predicated region
        $region61: #{tpu_custom_call.1} parent=11 // pred_check
          %p511 = pneg %p367
        $region62: #{tpu_custom_call.1} parent=11 // pred_check_branch
          %513 = sbr.rel (%p511) target = $region64
        $region63: #{tpu_custom_call.1} parent=11 // pred_region
          _
        $region64: #{tpu_custom_call.1} parent=11 // pred_fallthru
          _
        // Predicated region
        $region65: #{tpu_custom_call.1} parent=11 // pred_check
          %p514 = pneg %p388
        $region66: #{tpu_custom_call.1} parent=11 // pred_check_branch
          %516 = sbr.rel (%p514) target = $region68
        $region67: #{tpu_custom_call.1} parent=11 // pred_region
          _
        $region68: #{tpu_custom_call.1} parent=11 // pred_fallthru
          _
      $region12: #{tpu_custom_call.1} parent=5 // pred_fallthru
        _
      %p517 = scmp.lt.s32.totalorder %s28, 2
      // Predicated region
      $region69: #{tpu_custom_call.1} parent=5 // pred_check
        %p518 = pneg %p517
      $region70: #{tpu_custom_call.1} parent=5 // pred_check_branch
        %520 = sbr.rel (%p518) target = $region72
      $region71: #{tpu_custom_call.1} parent=5 // pred_region
        // Predicated region
        $region73: #{tpu_custom_call.1} parent=71 // pred_check
          %p521 = pneg %p62
        $region74: #{tpu_custom_call.1} parent=71 // pred_check_branch
          %523 = sbr.rel (%p521) target = $region76
        $region75: #{tpu_custom_call.1} parent=71 // pred_region
          %p524 = scmp.lt.s32.totalorder %s35, 1
          %s525 = scalar_select %p524, %s35, 1
          %p526 = scmp.lt.s32.totalorder %s36, 0
          %s527 = scalar_select %p526, %s36, 0
          %s528 = sadd.s32 %s527, %s525
          %s529 = smul.addr %s528, 8
          %s530 = scalar_lea.vmem %s0, %s529
        $region76: #{tpu_custom_call.1} parent=71 // pred_fallthru
          _
        // Predicated region
        $region77: #{tpu_custom_call.1} parent=71 // pred_check
          %p531 = pneg %p88
        $region78: #{tpu_custom_call.1} parent=71 // pred_check_branch
          %533 = sbr.rel (%p531) target = $region80
        $region79: #{tpu_custom_call.1} parent=71 // pred_region
          %p534 = scmp.lt.s32.totalorder %s35, 1
          %s535 = scalar_select %p534, %s35, 1
          %s536 = smul.addr %s535, 8
          %s537 = scalar_lea.vmem %s1, %s536
        $region80: #{tpu_custom_call.1} parent=71 // pred_fallthru
          _
      $region72: #{tpu_custom_call.1} parent=5 // pred_fallthru
        _
      %p538 = scmp.le.s32.totalorder 1, %s28
      %p539 = scmp.lt.s32.totalorder %s28, 3
      %p540 = pnand %p538, %p539
      %p541 = pneg %p540
      // Predicated region
      $region81: #{tpu_custom_call.1} parent=5 // pred_check
        _
      $region82: #{tpu_custom_call.1} parent=5 // pred_check_branch
        %543 = sbr.rel (%p540) target = $region84
      $region83: #{tpu_custom_call.1} parent=5 // pred_region
        %s544 = ssub.s32 %s28, 1
        // Predicated region
        $region85: #{tpu_custom_call.1} parent=83 // pred_check
          %p545 = pneg %p157
        $region86: #{tpu_custom_call.1} parent=83 // pred_check_branch
          %547 = sbr.rel (%p545) target = $region88
        $region87: #{tpu_custom_call.1} parent=83 // pred_region
          %548 = dma.done [#allocation3], 256
        $region88: #{tpu_custom_call.1} parent=83 // pred_fallthru
          _
        // Predicated region
        $region89: #{tpu_custom_call.1} parent=83 // pred_check
          %p549 = pneg %p199
        $region90: #{tpu_custom_call.1} parent=83 // pred_check_branch
          %551 = sbr.rel (%p549) target = $region92
        $region91: #{tpu_custom_call.1} parent=83 // pred_region
          %552 = dma.done [#allocation6], 256
        $region92: #{tpu_custom_call.1} parent=83 // pred_fallthru
          _
        // Predicated region
        $region93: #{tpu_custom_call.1} parent=83 // pred_check
          %p553 = pneg %p220
        $region94: #{tpu_custom_call.1} parent=83 // pred_check_branch
          %555 = sbr.rel (%p553) target = $region96
        $region95: #{tpu_custom_call.1} parent=83 // pred_region
          %556 = dma.done [#allocation6], 16
        $region96: #{tpu_custom_call.1} parent=83 // pred_fallthru
          _
        // Predicated region
        $region97: #{tpu_custom_call.1} parent=83 // pred_check
          %p557 = pneg %p241
        $region98: #{tpu_custom_call.1} parent=83 // pred_check_branch
          %559 = sbr.rel (%p557) target = $region100
        $region99: #{tpu_custom_call.1} parent=83 // pred_region
          %560 = dma.done [#allocation9], 16
        $region100: #{tpu_custom_call.1} parent=83 // pred_fallthru
          _
        // Predicated region
        $region101: #{tpu_custom_call.1} parent=83 // pred_check
          %p561 = pneg %p262
        $region102: #{tpu_custom_call.1} parent=83 // pred_check_branch
          %563 = sbr.rel (%p561) target = $region104
        $region103: #{tpu_custom_call.1} parent=83 // pred_region
          %564 = dma.done [#allocation9], 16
        $region104: #{tpu_custom_call.1} parent=83 // pred_fallthru
          _
        %p565 = scmp.lt.s32.totalorder %s37, 1
        %s566 = scalar_select %p565, %s37, 1
        %p567 = scmp.lt.s32.totalorder %s38, 0
        %s568 = scalar_select %p567, %s38, 0
        %s569 = sadd.s32 %s568, %s566
        %s570 = smul.addr %s569, 8
        %s571 = scalar_lea.vmem %s0, %s570
        %p572 = pneg %p68
        %p573 = pneg %p65
        %p574 = scmp.lt.s32.totalorder %s37, 1
        %s575 = scalar_select %p574, %s37, 1
        %s576 = smul.addr %s575, 8
        %s577 = scalar_lea.vmem %s1, %s576
        %p578 = pneg %p94
        %p579 = pneg %p91
        %p580 = pneg %p115
        %p581 = pneg %p112
        %p582 = pneg %p136
        %p583 = pneg %p133
        %p584 = pneg %p157
        %p585 = pneg %p154
        %p586 = pneg %p178
        %p587 = pneg %p175
        %p588 = pneg %p199
        %p589 = pneg %p196
        %p590 = pneg %p220
        %p591 = pneg %p217
        %p592 = pneg %p241
        %p593 = pneg %p238
        %p594 = pneg %p262
        %p595 = pneg %p259
        %p596 = pneg %p283
        %p597 = pneg %p280
        %p598 = pneg %p304
        %p599 = pneg %p301
        %p600 = pneg %p325
        %p601 = pneg %p322
        %p602 = pneg %p346
        %p603 = pneg %p343
        %p604 = pneg %p367
        %p605 = pneg %p364
        %p606 = pneg %p388
        %p607 = pneg %p385
        %p608 = pneg %p416
        %p609 = pneg %p413
        %s610 = sand.u32 %s403, 1
        %s611 = scalar_lea.sflag [#allocation4], %s610
        %s612 = sand.u32 %s403, 1
        %s613 = smul.addr %s612, 8
        %s614 = scalar_lea.vmem [#allocation11], %s613
        %p615 = scmp.lt.s32.totalorder %s37, 1
        %s616 = scalar_select %p615, %s37, 1
        %p617 = scmp.lt.s32.totalorder %s38, 0
        %s618 = scalar_select %p617, %s38, 0
        %s619 = sadd.s32 %s618, %s616
        %s620 = smul.addr %s619, 8
        %s621 = scalar_lea.vmem %s0, %s620
        %p622 = scmp.lt.s32.totalorder %s37, 1
        %s623 = scalar_select %p622, %s37, 1
        %s624 = smul.addr %s623, 8
        %s625 = scalar_lea.vmem %s1, %s624
        %v627 = vld [vmem:[%s621] sm:$0xff]
        %v628 = vld [vmem:[%s625] sm:$0xff]
        %v629 = vpack.c.bf16 %v627, %v627
        %v630 = vpack.c.bf16 %v628, %v628
        %v631 = vld [vmem:[%s2] sm:$0xf]
        %v632 = vld [vmem:[%s2 + $0x4] sm:$0xf]
        %v633 = vld [vmem:[%s2 + $0x8] sm:$0xf]
        %v634 = vld [vmem:[%s2 + $0xc] sm:$0xf]
        %v635 = vld [vmem:[%s3] sm:$0x1]
        %v637 = vlaneseq
        %v638 = vshrl.u32 %v637, 7
        %v639 = vsub.s32 0, %v638
        %v640 = vrot.slane %v635, %v639
        %v646 = vunpack.c.l.b16 %v631
        %v647 = vunpack.c.l.b16 %v632
        %v648 = vunpack.c.l.b16 %v633
        %v649 = vunpack.c.l.b16 %v634
        %v650 = vpack.c.b16 %v647, %v646
        %v651 = vpack.c.b16 %v649, %v648
        %vm654 = vcmask 261120
        %v656 = vsel %vm654, %v629, 0
        %658 = vmatprep.subr.bf16.mxu0 0
        %659 = vmatpush1.bf16.msra.mxu0 %v650
        %660 = vmatprep.subr.bf16.mxu0 0
        %661 = vmatpush1.bf16.msra.mxu0 %v651
        %662 = vmatprep.subr.bf16.mxu0 0
        %663 = vmatpush1.bf16.msra.mxu0 0
        %664 = vmatprep.subr.bf16.mxu0 0
        %665 = vmatpush1.bf16.msra.mxu0 0
        %666 = vmatprep.subr.bf16.mxu0 0
        %667 = vmatpush1.bf16.msra.mxu0 0
        %668 = vmatprep.subr.bf16.mxu0 0
        %669 = vmatpush1.bf16.msra.mxu0 0
        %670 = vmatprep.subr.bf16.mxu0 0
        %671 = vmatpush1.bf16.msra.mxu0 0
        %672 = vmatprep.subr.bf16.mxu0 0
        %673 = vmatpush1.bf16.msra.mxu0 0
        %674 = vmatprep.subr.bf16.mxu0 0
        %675 = vmatpush1.bf16.msra.mxu0 0
        %676 = vmatprep.subr.bf16.mxu0 0
        %677 = vmatpush1.bf16.msra.mxu0 0
        %678 = vmatprep.subr.bf16.mxu0 0
        %679 = vmatpush1.bf16.msra.mxu0 0
        %680 = vmatprep.subr.bf16.mxu0 0
        %681 = vmatpush1.bf16.msra.mxu0 0
        %682 = vmatprep.subr.bf16.mxu0 0
        %683 = vmatpush1.bf16.msra.mxu0 0
        %684 = vmatprep.subr.bf16.mxu0 0
        %685 = vmatpush1.bf16.msra.mxu0 0
        %686 = vmatprep.subr.bf16.mxu0 0
        %687 = vmatpush1.bf16.msra.mxu0 0
        %688 = vmatprep.subr.bf16.mxu0 0
        %689 = vmatpush1.bf16.msra.mxu0 0
        %690 = vmatprep.mubr.bf16.mxu0 0
        %691 = vmatmul.mubr.bf16.gmra.mrb[0].mxu0 %v656
        %v692 = vpop.f32.mrb[0].mxu0
        %v693 = vadd.f32 %v640, %v692
        %v694 = vpop.f32.mrb[0].mxu0
        %v695 = vpop.f32.mrb[0].mxu0
        %v696 = vpop.f32.mrb[0].mxu0
        %697 = vdwg.mxu0
        %v698 = vmul.f32 %v693, 0.35355338
        %v699 = vpack.c.bf16 %v698, %v698
        %v700 = vld [vmem:[#allocation2] sm:$0xf]
        %v701 = vld [vmem:[#allocation2 + $0x4] sm:$0xf]
        %v702 = vld [vmem:[#allocation2 + $0x8] sm:$0xf]
        %v703 = vld [vmem:[#allocation2 + $0xc] sm:$0xf]
        %v704 = vld [vmem:[%s5] sm:$0x1]
        %v706 = vlaneseq
        %v707 = vshrl.u32 %v706, 7
        %v708 = vsub.s32 0, %v707
        %v709 = vrot.slane %v704, %v708
        %v715 = vunpack.c.l.b16 %v700
        %v716 = vunpack.c.l.b16 %v701
        %v717 = vunpack.c.l.b16 %v702
        %v718 = vunpack.c.l.b16 %v703
        %v719 = vpack.c.b16 %v716, %v715
        %v720 = vpack.c.b16 %v718, %v717
        %v724 = vsel %vm654, %v630, 0
        %726 = vmatprep.subr.bf16.mxu0 0
        %727 = vmatpush1.bf16.msra.mxu0 %v719
        %728 = vmatprep.subr.bf16.mxu0 0
        %729 = vmatpush1.bf16.msra.mxu0 %v720
        %730 = vmatprep.subr.bf16.mxu0 0
        %731 = vmatpush1.bf16.msra.mxu0 0
        %732 = vmatprep.subr.bf16.mxu0 0
        %733 = vmatpush1.bf16.msra.mxu0 0
        %734 = vmatprep.subr.bf16.mxu0 0
        %735 = vmatpush1.bf16.msra.mxu0 0
        %736 = vmatprep.subr.bf16.mxu0 0
        %737 = vmatpush1.bf16.msra.mxu0 0
        %738 = vmatprep.subr.bf16.mxu0 0
        %739 = vmatpush1.bf16.msra.mxu0 0
        %740 = vmatprep.subr.bf16.mxu0 0
        %741 = vmatpush1.bf16.msra.mxu0 0
        %742 = vmatprep.subr.bf16.mxu0 0
        %743 = vmatpush1.bf16.msra.mxu0 0
        %744 = vmatprep.subr.bf16.mxu0 0
        %745 = vmatpush1.bf16.msra.mxu0 0
        %746 = vmatprep.subr.bf16.mxu0 0
        %747 = vmatpush1.bf16.msra.mxu0 0
        %748 = vmatprep.subr.bf16.mxu0 0
        %749 = vmatpush1.bf16.msra.mxu0 0
        %750 = vmatprep.subr.bf16.mxu0 0
        %751 = vmatpush1.bf16.msra.mxu0 0
        %752 = vmatprep.subr.bf16.mxu0 0
        %753 = vmatpush1.bf16.msra.mxu0 0
        %754 = vmatprep.subr.bf16.mxu0 0
        %755 = vmatpush1.bf16.msra.mxu0 0
        %756 = vmatprep.subr.bf16.mxu0 0
        %757 = vmatpush1.bf16.msra.mxu0 0
        %758 = vmatprep.mubr.bf16.mxu0 0
        %759 = vmatmul.mubr.bf16.gmra.mrb[0].mxu0 %v724
        %v760 = vpop.f32.mrb[0].mxu0
        %v761 = vadd.f32 %v709, %v760
        %v762 = vpop.f32.mrb[0].mxu0
        %v763 = vpop.f32.mrb[0].mxu0
        %v764 = vpop.f32.mrb[0].mxu0
        %765 = vdwg.mxu0
        %v766 = vpack.c.bf16 %v761, %v761
        %v767 = vld [vmem:[#allocation5] sm:$0xf]
        %v768 = vld [vmem:[#allocation5 + $0x4] sm:$0xf]
        %v769 = vld [vmem:[#allocation5 + $0x8] sm:$0xf]
        %v770 = vld [vmem:[#allocation5 + $0xc] sm:$0xf]
        %vm771 = vcmask 64512
        %v773 = vsel %vm771, %v699, 0
        %v776 = vsel %vm771, %v766, 0
        %778 = vmatprep.subr.bf16.mxu0 0
        %779 = vmatpush1.bf16.xpose.msra.mxu0 %v776
        %780 = vmatprep.subr.bf16.mxu0 0
        %781 = vmatpush1.bf16.xpose.msra.mxu0 0
        %782 = vmatprep.subr.bf16.mxu0 0
        %783 = vmatpush1.bf16.xpose.msra.mxu0 0
        %784 = vmatprep.subr.bf16.mxu0 0
        %785 = vmatpush1.bf16.xpose.msra.mxu0 0
        %786 = vmatprep.subr.bf16.mxu0 0
        %787 = vmatpush1.bf16.xpose.msra.mxu0 0
        %788 = vmatprep.subr.bf16.mxu0 0
        %789 = vmatpush1.bf16.xpose.msra.mxu0 0
        %790 = vmatprep.subr.bf16.mxu0 0
        %791 = vmatpush1.bf16.xpose.msra.mxu0 0
        %792 = vmatprep.subr.bf16.mxu0 0
        %793 = vmatpush1.bf16.xpose.msra.mxu0 0
        %794 = vmatprep.subr.bf16.mxu0 0
        %795 = vmatpush1.bf16.xpose.msra.mxu0 0
        %796 = vmatprep.subr.bf16.mxu0 0
        %797 = vmatpush1.bf16.xpose.msra.mxu0 0
        %798 = vmatprep.subr.bf16.mxu0 0
        %799 = vmatpush1.bf16.xpose.msra.mxu0 0
        %800 = vmatprep.subr.bf16.mxu0 0
        %801 = vmatpush1.bf16.xpose.msra.mxu0 0
        %802 = vmatprep.subr.bf16.mxu0 0
        %803 = vmatpush1.bf16.xpose.msra.mxu0 0
        %804 = vmatprep.subr.bf16.mxu0 0
        %805 = vmatpush1.bf16.xpose.msra.mxu0 0
        %806 = vmatprep.subr.bf16.mxu0 0
        %807 = vmatpush1.bf16.xpose.msra.mxu0 0
        %808 = vmatprep.subr.bf16.mxu0 0
        %809 = vmatpush1.bf16.xpose.msra.mxu0 0
        %810 = vmatprep.mubr.bf16.mxu0 0
        %811 = vmatmul.mubr.bf16.gmra.mrb[0].mxu0 %v773
        %v812 = vpop.f32.mrb[0].mxu0
        %v813 = vadd.f32 0.0, %v812
        %v814 = vpop.f32.mrb[0].mxu0
        %v815 = vpop.f32.mrb[0].mxu0
        %v816 = vpop.f32.mrb[0].mxu0
        %817 = vdwg.mxu0
        %v818 = vsel %vm771, %v813, -inf
        %819 = vmax.xlane.f32.xlu0 %v818
        %v820 = vpop.xlane.xlu0 %819
        %v821 = vsub.f32 %v813, %v820
        %v822 = vmul.f32 %v821, 1.442695
        %v823 = vpow.pop %v822
        %v824 = vsel %vm771, %v823, 0.0
        %825 = vadd.xlane.f32.xlu0 %v824
        %v826 = vpop.xlane.xlu0 %825
        %v827 = vrcp.pop %v826
        %v828 = vmul.f32 %v823, %v827
        %v829 = vpack.c.bf16 %v828, %v828
        %831 = vrot.lane.b32.xlu0 %v766, 96
        %v832 = vpop.permute.xlu0 %831
        %v834 = vsel %vm771, %v829, 0
        %vm836 = vcmask 1043456
        %v838 = vsel %vm836, %v832, 0
        %840 = vmatprep.subr.bf16.mxu0 0
        %841 = vmatpush1.bf16.msra.mxu0 %v838
        %842 = vmatprep.subr.bf16.mxu0 0
        %843 = vmatpush1.bf16.msra.mxu0 0
        %844 = vmatprep.subr.bf16.mxu0 0
        %845 = vmatpush1.bf16.msra.mxu0 0
        %846 = vmatprep.subr.bf16.mxu0 0
        %847 = vmatpush1.bf16.msra.mxu0 0
        %848 = vmatprep.subr.bf16.mxu0 0
        %849 = vmatpush1.bf16.msra.mxu0 0
        %850 = vmatprep.subr.bf16.mxu0 0
        %851 = vmatpush1.bf16.msra.mxu0 0
        %852 = vmatprep.subr.bf16.mxu0 0
        %853 = vmatpush1.bf16.msra.mxu0 0
        %854 = vmatprep.subr.bf16.mxu0 0
        %855 = vmatpush1.bf16.msra.mxu0 0
        %856 = vmatprep.subr.bf16.mxu0 0
        %857 = vmatpush1.bf16.msra.mxu0 0
        %858 = vmatprep.subr.bf16.mxu0 0
        %859 = vmatpush1.bf16.msra.mxu0 0
        %860 = vmatprep.subr.bf16.mxu0 0
        %861 = vmatpush1.bf16.msra.mxu0 0
        %862 = vmatprep.subr.bf16.mxu0 0
        %863 = vmatpush1.bf16.msra.mxu0 0
        %864 = vmatprep.subr.bf16.mxu0 0
        %865 = vmatpush1.bf16.msra.mxu0 0
        %866 = vmatprep.subr.bf16.mxu0 0
        %867 = vmatpush1.bf16.msra.mxu0 0
        %868 = vmatprep.subr.bf16.mxu0 0
        %869 = vmatpush1.bf16.msra.mxu0 0
        %870 = vmatprep.subr.bf16.mxu0 0
        %871 = vmatpush1.bf16.msra.mxu0 0
        %872 = vmatprep.mubr.bf16.mxu0 0
        %873 = vmatmul.mubr.bf16.gmra.mrb[0].mxu0 %v834
        %v874 = vpop.f32.mrb[0].mxu0
        %v875 = vadd.f32 0.0, %v874
        %v876 = vpop.f32.mrb[0].mxu0
        %v877 = vpop.f32.mrb[0].mxu0
        %v878 = vpop.f32.mrb[0].mxu0
        %879 = vdwg.mxu0
        %v880 = vpack.c.bf16 %v875, %v875
        %882 = vrot.lane.b32.xlu0 %v699, 120
        %v883 = vpop.permute.xlu0 %882
        %884 = vrot.lane.b32.xlu0 %v766, 120
        %v885 = vpop.permute.xlu0 %884
        %v887 = vsel %vm771, %v883, 0
        %v890 = vsel %vm771, %v885, 0
        %892 = vmatprep.subr.bf16.mxu0 0
        %893 = vmatpush1.bf16.xpose.msra.mxu0 %v890
        %894 = vmatprep.subr.bf16.mxu0 0
        %895 = vmatpush1.bf16.xpose.msra.mxu0 0
        %896 = vmatprep.subr.bf16.mxu0 0
        %897 = vmatpush1.bf16.xpose.msra.mxu0 0
        %898 = vmatprep.subr.bf16.mxu0 0
        %899 = vmatpush1.bf16.xpose.msra.mxu0 0
        %900 = vmatprep.subr.bf16.mxu0 0
        %901 = vmatpush1.bf16.xpose.msra.mxu0 0
        %902 = vmatprep.subr.bf16.mxu0 0
        %903 = vmatpush1.bf16.xpose.msra.mxu0 0
        %904 = vmatprep.subr.bf16.mxu0 0
        %905 = vmatpush1.bf16.xpose.msra.mxu0 0
        %906 = vmatprep.subr.bf16.mxu0 0
        %907 = vmatpush1.bf16.xpose.msra.mxu0 0
        %908 = vmatprep.subr.bf16.mxu0 0
        %909 = vmatpush1.bf16.xpose.msra.mxu0 0
        %910 = vmatprep.subr.bf16.mxu0 0
        %911 = vmatpush1.bf16.xpose.msra.mxu0 0
        %912 = vmatprep.subr.bf16.mxu0 0
        %913 = vmatpush1.bf16.xpose.msra.mxu0 0
        %914 = vmatprep.subr.bf16.mxu0 0
        %915 = vmatpush1.bf16.xpose.msra.mxu0 0
        %916 = vmatprep.subr.bf16.mxu0 0
        %917 = vmatpush1.bf16.xpose.msra.mxu0 0
        %918 = vmatprep.subr.bf16.mxu0 0
        %919 = vmatpush1.bf16.xpose.msra.mxu0 0
        %920 = vmatprep.subr.bf16.mxu0 0
        %921 = vmatpush1.bf16.xpose.msra.mxu0 0
        %922 = vmatprep.subr.bf16.mxu0 0
        %923 = vmatpush1.bf16.xpose.msra.mxu0 0
        %924 = vmatprep.mubr.bf16.mxu0 0
        %925 = vmatmul.mubr.bf16.gmra.mrb[0].mxu0 %v887
        %v926 = vpop.f32.mrb[0].mxu0
        %v927 = vadd.f32 0.0, %v926
        %v928 = vpop.f32.mrb[0].mxu0
        %v929 = vpop.f32.mrb[0].mxu0
        %v930 = vpop.f32.mrb[0].mxu0
        %931 = vdwg.mxu0
        %v932 = vsel %vm771, %v927, -inf
        %933 = vmax.xlane.f32.xlu0 %v932
        %v934 = vpop.xlane.xlu0 %933
        %v935 = vsub.f32 %v927, %v934
        %v936 = vmul.f32 %v935, 1.442695
        %v937 = vpow.pop %v936
        %v938 = vsel %vm771, %v937, 0.0
        %939 = vadd.xlane.f32.xlu0 %v938
        %v940 = vpop.xlane.xlu0 %939
        %v941 = vrcp.pop %v940
        %v942 = vmul.f32 %v937, %v941
        %v943 = vpack.c.bf16 %v942, %v942
        %944 = vrot.lane.b32.xlu0 %v766, 88
        %v945 = vpop.permute.xlu0 %944
        %v947 = vsel %vm771, %v943, 0
        %v950 = vsel %vm836, %v945, 0
        %952 = vmatprep.subr.bf16.mxu0 0
        %953 = vmatpush1.bf16.msra.mxu0 %v950
        %954 = vmatprep.subr.bf16.mxu0 0
        %955 = vmatpush1.bf16.msra.mxu0 0
        %956 = vmatprep.subr.bf16.mxu0 0
        %957 = vmatpush1.bf16.msra.mxu0 0
        %958 = vmatprep.subr.bf16.mxu0 0
        %959 = vmatpush1.bf16.msra.mxu0 0
        %960 = vmatprep.subr.bf16.mxu0 0
        %961 = vmatpush1.bf16.msra.mxu0 0
        %962 = vmatprep.subr.bf16.mxu0 0
        %963 = vmatpush1.bf16.msra.mxu0 0
        %964 = vmatprep.subr.bf16.mxu0 0
        %965 = vmatpush1.bf16.msra.mxu0 0
        %966 = vmatprep.subr.bf16.mxu0 0
        %967 = vmatpush1.bf16.msra.mxu0 0
        %968 = vmatprep.subr.bf16.mxu0 0
        %969 = vmatpush1.bf16.msra.mxu0 0
        %970 = vmatprep.subr.bf16.mxu0 0
        %971 = vmatpush1.bf16.msra.mxu0 0
        %972 = vmatprep.subr.bf16.mxu0 0
        %973 = vmatpush1.bf16.msra.mxu0 0
        %974 = vmatprep.subr.bf16.mxu0 0
        %975 = vmatpush1.bf16.msra.mxu0 0
        %976 = vmatprep.subr.bf16.mxu0 0
        %977 = vmatpush1.bf16.msra.mxu0 0
        %978 = vmatprep.subr.bf16.mxu0 0
        %979 = vmatpush1.bf16.msra.mxu0 0
        %980 = vmatprep.subr.bf16.mxu0 0
        %981 = vmatpush1.bf16.msra.mxu0 0
        %982 = vmatprep.subr.bf16.mxu0 0
        %983 = vmatpush1.bf16.msra.mxu0 0
        %984 = vmatprep.mubr.bf16.mxu0 0
        %985 = vmatmul.mubr.bf16.gmra.mrb[0].mxu0 %v947
        %v986 = vpop.f32.mrb[0].mxu0
        %v987 = vadd.f32 0.0, %v986
        %v988 = vpop.f32.mrb[0].mxu0
        %v989 = vpop.f32.mrb[0].mxu0
        %v990 = vpop.f32.mrb[0].mxu0
        %991 = vdwg.mxu0
        %v992 = vpack.c.bf16 %v987, %v987
        %v994 = vsel %vm771, %v992, 0
        %v997 = vsel %vm836, %v768, 0
        %999 = vmatprep.subr.bf16.mxu0 0
        %1000 = vmatpush1.bf16.msra.mxu0 %v997
        %1001 = vmatprep.subr.bf16.mxu0 0
        %1002 = vmatpush1.bf16.msra.mxu0 0
        %1003 = vmatprep.subr.bf16.mxu0 0
        %1004 = vmatpush1.bf16.msra.mxu0 0
        %1005 = vmatprep.subr.bf16.mxu0 0
        %1006 = vmatpush1.bf16.msra.mxu0 0
        %1007 = vmatprep.subr.bf16.mxu0 0
        %1008 = vmatpush1.bf16.msra.mxu0 0
        %1009 = vmatprep.subr.bf16.mxu0 0
        %1010 = vmatpush1.bf16.msra.mxu0 0
        %1011 = vmatprep.subr.bf16.mxu0 0
        %1012 = vmatpush1.bf16.msra.mxu0 0
        %1013 = vmatprep.subr.bf16.mxu0 0
        %1014 = vmatpush1.bf16.msra.mxu0 0
        %1015 = vmatprep.subr.bf16.mxu0 0
        %1016 = vmatpush1.bf16.msra.mxu0 0
        %1017 = vmatprep.subr.bf16.mxu0 0
        %1018 = vmatpush1.bf16.msra.mxu0 0
        %1019 = vmatprep.subr.bf16.mxu0 0
        %1020 = vmatpush1.bf16.msra.mxu0 0
        %1021 = vmatprep.subr.bf16.mxu0 0
        %1022 = vmatpush1.bf16.msra.mxu0 0
        %1023 = vmatprep.subr.bf16.mxu0 0
        %1024 = vmatpush1.bf16.msra.mxu0 0
        %1025 = vmatprep.subr.bf16.mxu0 0
        %1026 = vmatpush1.bf16.msra.mxu0 0
        %1027 = vmatprep.subr.bf16.mxu0 0
        %1028 = vmatpush1.bf16.msra.mxu0 0
        %1029 = vmatprep.subr.bf16.mxu0 0
        %1030 = vmatpush1.bf16.msra.mxu0 0
        %1031 = vmatprep.mubr.bf16.mxu0 0
        %1032 = vmatmul.mubr.bf16.gmra.mrb[0].mxu0 %v994
        %v1033 = vpop.f32.mrb[0].mxu0
        %v1034 = vadd.f32 0.0, %v1033
        %v1035 = vpop.f32.mrb[0].mxu0
        %v1036 = vpop.f32.mrb[0].mxu0
        %v1037 = vpop.f32.mrb[0].mxu0
        %1038 = vdwg.mxu0
        %v1040 = vsel %vm771, %v880, 0
        %v1043 = vsel %vm836, %v767, 0
        %1045 = vmatprep.subr.bf16.mxu0 0
        %1046 = vmatpush1.bf16.msra.mxu0 %v1043
        %1047 = vmatprep.subr.bf16.mxu0 0
        %1048 = vmatpush1.bf16.msra.mxu0 0
        %1049 = vmatprep.subr.bf16.mxu0 0
        %1050 = vmatpush1.bf16.msra.mxu0 0
        %1051 = vmatprep.subr.bf16.mxu0 0
        %1052 = vmatpush1.bf16.msra.mxu0 0
        %1053 = vmatprep.subr.bf16.mxu0 0
        %1054 = vmatpush1.bf16.msra.mxu0 0
        %1055 = vmatprep.subr.bf16.mxu0 0
        %1056 = vmatpush1.bf16.msra.mxu0 0
        %1057 = vmatprep.subr.bf16.mxu0 0
        %1058 = vmatpush1.bf16.msra.mxu0 0
        %1059 = vmatprep.subr.bf16.mxu0 0
        %1060 = vmatpush1.bf16.msra.mxu0 0
        %1061 = vmatprep.subr.bf16.mxu0 0
        %1062 = vmatpush1.bf16.msra.mxu0 0
        %1063 = vmatprep.subr.bf16.mxu0 0
        %1064 = vmatpush1.bf16.msra.mxu0 0
        %1065 = vmatprep.subr.bf16.mxu0 0
        %1066 = vmatpush1.bf16.msra.mxu0 0
        %1067 = vmatprep.subr.bf16.mxu0 0
        %1068 = vmatpush1.bf16.msra.mxu0 0
        %1069 = vmatprep.subr.bf16.mxu0 0
        %1070 = vmatpush1.bf16.msra.mxu0 0
        %1071 = vmatprep.subr.bf16.mxu0 0
        %1072 = vmatpush1.bf16.msra.mxu0 0
        %1073 = vmatprep.subr.bf16.mxu0 0
        %1074 = vmatpush1.bf16.msra.mxu0 0
        %1075 = vmatprep.subr.bf16.mxu0 0
        %1076 = vmatpush1.bf16.msra.mxu0 0
        %1077 = vmatprep.mubr.bf16.mxu0 0
        %1078 = vmatmul.mubr.bf16.gmra.mrb[0].mxu0 %v1040
        %v1079 = vpop.f32.mrb[0].mxu0
        %v1080 = vadd.f32 %v1034, %v1079
        %v1081 = vpop.f32.mrb[0].mxu0
        %v1082 = vpop.f32.mrb[0].mxu0
        %v1083 = vpop.f32.mrb[0].mxu0
        %1084 = vdwg.mxu0
        %1085 = vrot.lane.b32.xlu0 %v699, 112
        %v1086 = vpop.permute.xlu0 %1085
        %1087 = vrot.lane.b32.xlu0 %v766, 112
        %v1088 = vpop.permute.xlu0 %1087
        %v1090 = vsel %vm771, %v1086, 0
        %v1093 = vsel %vm771, %v1088, 0
        %1095 = vmatprep.subr.bf16.mxu0 0
        %1096 = vmatpush1.bf16.xpose.msra.mxu0 %v1093
        %1097 = vmatprep.subr.bf16.mxu0 0
        %1098 = vmatpush1.bf16.xpose.msra.mxu0 0
        %1099 = vmatprep.subr.bf16.mxu0 0
        %1100 = vmatpush1.bf16.xpose.msra.mxu0 0
        %1101 = vmatprep.subr.bf16.mxu0 0
        %1102 = vmatpush1.bf16.xpose.msra.mxu0 0
        %1103 = vmatprep.subr.bf16.mxu0 0
        %1104 = vmatpush1.bf16.xpose.msra.mxu0 0
        %1105 = vmatprep.subr.bf16.mxu0 0
        %1106 = vmatpush1.bf16.xpose.msra.mxu0 0
        %1107 = vmatprep.subr.bf16.mxu0 0
        %1108 = vmatpush1.bf16.xpose.msra.mxu0 0
        %1109 = vmatprep.subr.bf16.mxu0 0
        %1110 = vmatpush1.bf16.xpose.msra.mxu0 0
        %1111 = vmatprep.subr.bf16.mxu0 0
        %1112 = vmatpush1.bf16.xpose.msra.mxu0 0
        %1113 = vmatprep.subr.bf16.mxu0 0
        %1114 = vmatpush1.bf16.xpose.msra.mxu0 0
        %1115 = vmatprep.subr.bf16.mxu0 0
        %1116 = vmatpush1.bf16.xpose.msra.mxu0 0
        %1117 = vmatprep.subr.bf16.mxu0 0
        %1118 = vmatpush1.bf16.xpose.msra.mxu0 0
        %1119 = vmatprep.subr.bf16.mxu0 0
        %1120 = vmatpush1.bf16.xpose.msra.mxu0 0
        %1121 = vmatprep.subr.bf16.mxu0 0
        %1122 = vmatpush1.bf16.xpose.msra.mxu0 0
        %1123 = vmatprep.subr.bf16.mxu0 0
        %1124 = vmatpush1.bf16.xpose.msra.mxu0 0
        %1125 = vmatprep.subr.bf16.mxu0 0
        %1126 = vmatpush1.bf16.xpose.msra.mxu0 0
        %1127 = vmatprep.mubr.bf16.mxu0 0
        %1128 = vmatmul.mubr.bf16.gmra.mrb[0].mxu0 %v1090
        %v1129 = vpop.f32.mrb[0].mxu0
        %v1130 = vadd.f32 0.0, %v1129
        %v1131 = vpop.f32.mrb[0].mxu0
        %v1132 = vpop.f32.mrb[0].mxu0
        %v1133 = vpop.f32.mrb[0].mxu0
        %1134 = vdwg.mxu0
        %v1135 = vsel %vm771, %v1130, -inf
        %1136 = vmax.xlane.f32.xlu0 %v1135
        %v1137 = vpop.xlane.xlu0 %1136
        %v1138 = vsub.f32 %v1130, %v1137
        %v1139 = vmul.f32 %v1138, 1.442695
        %v1140 = vpow.pop %v1139
        %v1141 = vsel %vm771, %v1140, 0.0
        %1142 = vadd.xlane.f32.xlu0 %v1141
        %v1143 = vpop.xlane.xlu0 %1142
        %v1144 = vrcp.pop %v1143
        %v1145 = vmul.f32 %v1140, %v1144
        %v1146 = vpack.c.bf16 %v1145, %v1145
        %1147 = vrot.lane.b32.xlu0 %v766, 80
        %v1148 = vpop.permute.xlu0 %1147
        %v1150 = vsel %vm771, %v1146, 0
        %v1153 = vsel %vm836, %v1148, 0
        %1155 = vmatprep.subr.bf16.mxu0 0
        %1156 = vmatpush1.bf16.msra.mxu0 %v1153
        %1157 = vmatprep.subr.bf16.mxu0 0
        %1158 = vmatpush1.bf16.msra.mxu0 0
        %1159 = vmatprep.subr.bf16.mxu0 0
        %1160 = vmatpush1.bf16.msra.mxu0 0
        %1161 = vmatprep.subr.bf16.mxu0 0
        %1162 = vmatpush1.bf16.msra.mxu0 0
        %1163 = vmatprep.subr.bf16.mxu0 0
        %1164 = vmatpush1.bf16.msra.mxu0 0
        %1165 = vmatprep.subr.bf16.mxu0 0
        %1166 = vmatpush1.bf16.msra.mxu0 0
        %1167 = vmatprep.subr.bf16.mxu0 0
        %1168 = vmatpush1.bf16.msra.mxu0 0
        %1169 = vmatprep.subr.bf16.mxu0 0
        %1170 = vmatpush1.bf16.msra.mxu0 0
        %1171 = vmatprep.subr.bf16.mxu0 0
        %1172 = vmatpush1.bf16.msra.mxu0 0
        %1173 = vmatprep.subr.bf16.mxu0 0
        %1174 = vmatpush1.bf16.msra.mxu0 0
        %1175 = vmatprep.subr.bf16.mxu0 0
        %1176 = vmatpush1.bf16.msra.mxu0 0
        %1177 = vmatprep.subr.bf16.mxu0 0
        %1178 = vmatpush1.bf16.msra.mxu0 0
        %1179 = vmatprep.subr.bf16.mxu0 0
        %1180 = vmatpush1.bf16.msra.mxu0 0
        %1181 = vmatprep.subr.bf16.mxu0 0
        %1182 = vmatpush1.bf16.msra.mxu0 0
        %1183 = vmatprep.subr.bf16.mxu0 0
        %1184 = vmatpush1.bf16.msra.mxu0 0
        %1185 = vmatprep.subr.bf16.mxu0 0
        %1186 = vmatpush1.bf16.msra.mxu0 0
        %1187 = vmatprep.mubr.bf16.mxu0 0
        %1188 = vmatmul.mubr.bf16.gmra.mrb[0].mxu0 %v1150
        %v1189 = vpop.f32.mrb[0].mxu0
        %v1190 = vadd.f32 0.0, %v1189
        %v1191 = vpop.f32.mrb[0].mxu0
        %v1192 = vpop.f32.mrb[0].mxu0
        %v1193 = vpop.f32.mrb[0].mxu0
        %1194 = vdwg.mxu0
        %v1195 = vpack.c.bf16 %v1190, %v1190
        %v1197 = vsel %vm771, %v1195, 0
        %v1200 = vsel %vm836, %v769, 0
        %1202 = vmatprep.subr.bf16.mxu0 0
        %1203 = vmatpush1.bf16.msra.mxu0 %v1200
        %1204 = vmatprep.subr.bf16.mxu0 0
        %1205 = vmatpush1.bf16.msra.mxu0 0
        %1206 = vmatprep.subr.bf16.mxu0 0
        %1207 = vmatpush1.bf16.msra.mxu0 0
        %1208 = vmatprep.subr.bf16.mxu0 0
        %1209 = vmatpush1.bf16.msra.mxu0 0
        %1210 = vmatprep.subr.bf16.mxu0 0
        %1211 = vmatpush1.bf16.msra.mxu0 0
        %1212 = vmatprep.subr.bf16.mxu0 0
        %1213 = vmatpush1.bf16.msra.mxu0 0
        %1214 = vmatprep.subr.bf16.mxu0 0
        %1215 = vmatpush1.bf16.msra.mxu0 0
        %1216 = vmatprep.subr.bf16.mxu0 0
        %1217 = vmatpush1.bf16.msra.mxu0 0
        %1218 = vmatprep.subr.bf16.mxu0 0
        %1219 = vmatpush1.bf16.msra.mxu0 0
        %1220 = vmatprep.subr.bf16.mxu0 0
        %1221 = vmatpush1.bf16.msra.mxu0 0
        %1222 = vmatprep.subr.bf16.mxu0 0
        %1223 = vmatpush1.bf16.msra.mxu0 0
        %1224 = vmatprep.subr.bf16.mxu0 0
        %1225 = vmatpush1.bf16.msra.mxu0 0
        %1226 = vmatprep.subr.bf16.mxu0 0
        %1227 = vmatpush1.bf16.msra.mxu0 0
        %1228 = vmatprep.subr.bf16.mxu0 0
        %1229 = vmatpush1.bf16.msra.mxu0 0
        %1230 = vmatprep.subr.bf16.mxu0 0
        %1231 = vmatpush1.bf16.msra.mxu0 0
        %1232 = vmatprep.subr.bf16.mxu0 0
        %1233 = vmatpush1.bf16.msra.mxu0 0
        %1234 = vmatprep.mubr.bf16.mxu0 0
        %1235 = vmatmul.mubr.bf16.gmra.mrb[0].mxu0 %v1197
        %v1236 = vpop.f32.mrb[0].mxu0
        %v1237 = vadd.f32 0.0, %v1236
        %v1238 = vpop.f32.mrb[0].mxu0
        %v1239 = vpop.f32.mrb[0].mxu0
        %v1240 = vpop.f32.mrb[0].mxu0
        %1241 = vdwg.mxu0
        %v1242 = vadd.f32 %v1080, %v1237
        %1243 = vrot.lane.b32.xlu0 %v699, 104
        %v1244 = vpop.permute.xlu0 %1243
        %1245 = vrot.lane.b32.xlu0 %v766, 104
        %v1246 = vpop.permute.xlu0 %1245
        %v1248 = vsel %vm771, %v1244, 0
        %v1251 = vsel %vm771, %v1246, 0
        %1253 = vmatprep.subr.bf16.mxu0 0
        %1254 = vmatpush1.bf16.xpose.msra.mxu0 %v1251
        %1255 = vmatprep.subr.bf16.mxu0 0
        %1256 = vmatpush1.bf16.xpose.msra.mxu0 0
        %1257 = vmatprep.subr.bf16.mxu0 0
        %1258 = vmatpush1.bf16.xpose.msra.mxu0 0
        %1259 = vmatprep.subr.bf16.mxu0 0
        %1260 = vmatpush1.bf16.xpose.msra.mxu0 0
        %1261 = vmatprep.subr.bf16.mxu0 0
        %1262 = vmatpush1.bf16.xpose.msra.mxu0 0
        %1263 = vmatprep.subr.bf16.mxu0 0
        %1264 = vmatpush1.bf16.xpose.msra.mxu0 0
        %1265 = vmatprep.subr.bf16.mxu0 0
        %1266 = vmatpush1.bf16.xpose.msra.mxu0 0
        %1267 = vmatprep.subr.bf16.mxu0 0
        %1268 = vmatpush1.bf16.xpose.msra.mxu0 0
        %1269 = vmatprep.subr.bf16.mxu0 0
        %1270 = vmatpush1.bf16.xpose.msra.mxu0 0
        %1271 = vmatprep.subr.bf16.mxu0 0
        %1272 = vmatpush1.bf16.xpose.msra.mxu0 0
        %1273 = vmatprep.subr.bf16.mxu0 0
        %1274 = vmatpush1.bf16.xpose.msra.mxu0 0
        %1275 = vmatprep.subr.bf16.mxu0 0
        %1276 = vmatpush1.bf16.xpose.msra.mxu0 0
        %1277 = vmatprep.subr.bf16.mxu0 0
        %1278 = vmatpush1.bf16.xpose.msra.mxu0 0
        %1279 = vmatprep.subr.bf16.mxu0 0
        %1280 = vmatpush1.bf16.xpose.msra.mxu0 0
        %1281 = vmatprep.subr.bf16.mxu0 0
        %1282 = vmatpush1.bf16.xpose.msra.mxu0 0
        %1283 = vmatprep.subr.bf16.mxu0 0
        %1284 = vmatpush1.bf16.xpose.msra.mxu0 0
        %1285 = vmatprep.mubr.bf16.mxu0 0
        %1286 = vmatmul.mubr.bf16.gmra.mrb[0].mxu0 %v1248
        %v1287 = vpop.f32.mrb[0].mxu0
        %v1288 = vadd.f32 0.0, %v1287
        %v1289 = vpop.f32.mrb[0].mxu0
        %v1290 = vpop.f32.mrb[0].mxu0
        %v1291 = vpop.f32.mrb[0].mxu0
        %1292 = vdwg.mxu0
        %v1293 = vsel %vm771, %v1288, -inf
        %1294 = vmax.xlane.f32.xlu0 %v1293
        %v1295 = vpop.xlane.xlu0 %1294
        %v1296 = vsub.f32 %v1288, %v1295
        %v1297 = vmul.f32 %v1296, 1.442695
        %v1298 = vpow.pop %v1297
        %v1299 = vsel %vm771, %v1298, 0.0
        %1300 = vadd.xlane.f32.xlu0 %v1299
        %v1301 = vpop.xlane.xlu0 %1300
        %v1302 = vrcp.pop %v1301
        %v1303 = vmul.f32 %v1298, %v1302
        %v1304 = vpack.c.bf16 %v1303, %v1303
        %1305 = vrot.lane.b32.xlu0 %v766, 72
        %v1306 = vpop.permute.xlu0 %1305
        %v1308 = vsel %vm771, %v1304, 0
        %v1311 = vsel %vm836, %v1306, 0
        %1313 = vmatprep.subr.bf16.mxu0 0
        %1314 = vmatpush1.bf16.msra.mxu0 %v1311
        %1315 = vmatprep.subr.bf16.mxu0 0
        %1316 = vmatpush1.bf16.msra.mxu0 0
        %1317 = vmatprep.subr.bf16.mxu0 0
        %1318 = vmatpush1.bf16.msra.mxu0 0
        %1319 = vmatprep.subr.bf16.mxu0 0
        %1320 = vmatpush1.bf16.msra.mxu0 0
        %1321 = vmatprep.subr.bf16.mxu0 0
        %1322 = vmatpush1.bf16.msra.mxu0 0
        %1323 = vmatprep.subr.bf16.mxu0 0
        %1324 = vmatpush1.bf16.msra.mxu0 0
        %1325 = vmatprep.subr.bf16.mxu0 0
        %1326 = vmatpush1.bf16.msra.mxu0 0
        %1327 = vmatprep.subr.bf16.mxu0 0
        %1328 = vmatpush1.bf16.msra.mxu0 0
        %1329 = vmatprep.subr.bf16.mxu0 0
        %1330 = vmatpush1.bf16.msra.mxu0 0
        %1331 = vmatprep.subr.bf16.mxu0 0
        %1332 = vmatpush1.bf16.msra.mxu0 0
        %1333 = vmatprep.subr.bf16.mxu0 0
        %1334 = vmatpush1.bf16.msra.mxu0 0
        %1335 = vmatprep.subr.bf16.mxu0 0
        %1336 = vmatpush1.bf16.msra.mxu0 0
        %1337 = vmatprep.subr.bf16.mxu0 0
        %1338 = vmatpush1.bf16.msra.mxu0 0
        %1339 = vmatprep.subr.bf16.mxu0 0
        %1340 = vmatpush1.bf16.msra.mxu0 0
        %1341 = vmatprep.subr.bf16.mxu0 0
        %1342 = vmatpush1.bf16.msra.mxu0 0
        %1343 = vmatprep.subr.bf16.mxu0 0
        %1344 = vmatpush1.bf16.msra.mxu0 0
        %1345 = vmatprep.mubr.bf16.mxu0 0
        %1346 = vmatmul.mubr.bf16.gmra.mrb[0].mxu0 %v1308
        %v1347 = vpop.f32.mrb[0].mxu0
        %v1348 = vadd.f32 0.0, %v1347
        %v1349 = vpop.f32.mrb[0].mxu0
        %v1350 = vpop.f32.mrb[0].mxu0
        %v1351 = vpop.f32.mrb[0].mxu0
        %1352 = vdwg.mxu0
        %v1353 = vpack.c.bf16 %v1348, %v1348
        %v1355 = vsel %vm771, %v1353, 0
        %v1358 = vsel %vm836, %v770, 0
        %1360 = vmatprep.subr.bf16.mxu0 0
        %1361 = vmatpush1.bf16.msra.mxu0 %v1358
        %1362 = vmatprep.subr.bf16.mxu0 0
        %1363 = vmatpush1.bf16.msra.mxu0 0
        %1364 = vmatprep.subr.bf16.mxu0 0
        %1365 = vmatpush1.bf16.msra.mxu0 0
        %1366 = vmatprep.subr.bf16.mxu0 0
        %1367 = vmatpush1.bf16.msra.mxu0 0
        %1368 = vmatprep.subr.bf16.mxu0 0
        %1369 = vmatpush1.bf16.msra.mxu0 0
        %1370 = vmatprep.subr.bf16.mxu0 0
        %1371 = vmatpush1.bf16.msra.mxu0 0
        %1372 = vmatprep.subr.bf16.mxu0 0
        %1373 = vmatpush1.bf16.msra.mxu0 0
        %1374 = vmatprep.subr.bf16.mxu0 0
        %1375 = vmatpush1.bf16.msra.mxu0 0
        %1376 = vmatprep.subr.bf16.mxu0 0
        %1377 = vmatpush1.bf16.msra.mxu0 0
        %1378 = vmatprep.subr.bf16.mxu0 0
        %1379 = vmatpush1.bf16.msra.mxu0 0
        %1380 = vmatprep.subr.bf16.mxu0 0
        %1381 = vmatpush1.bf16.msra.mxu0 0
        %1382 = vmatprep.subr.bf16.mxu0 0
        %1383 = vmatpush1.bf16.msra.mxu0 0
        %1384 = vmatprep.subr.bf16.mxu0 0
        %1385 = vmatpush1.bf16.msra.mxu0 0
        %1386 = vmatprep.subr.bf16.mxu0 0
        %1387 = vmatpush1.bf16.msra.mxu0 0
        %1388 = vmatprep.subr.bf16.mxu0 0
        %1389 = vmatpush1.bf16.msra.mxu0 0
        %1390 = vmatprep.subr.bf16.mxu0 0
        %1391 = vmatpush1.bf16.msra.mxu0 0
        %1392 = vmatprep.mubr.bf16.mxu0 0
        %1393 = vmatmul.mubr.bf16.gmra.mrb[0].mxu0 %v1355
        %v1394 = vpop.f32.mrb[0].mxu0
        %v1395 = vadd.f32 0.0, %v1394
        %v1396 = vpop.f32.mrb[0].mxu0
        %v1397 = vpop.f32.mrb[0].mxu0
        %v1398 = vpop.f32.mrb[0].mxu0
        %1399 = vdwg.mxu0
        %v1400 = vadd.f32 %v1242, %v1395
        %v1401 = vld [vmem:[#allocation7] sm:$0x1]
        %v1403 = vlaneseq
        %v1404 = vshrl.u32 %v1403, 7
        %v1405 = vsub.s32 0, %v1404
        %v1406 = vrot.slane %v1401, %v1405
        %v1408 = vadd.f32 %v1400, %v1406
        %v1409 = vadd.f32 %v627, %v1408
        %v1410 = vld [vmem:[#allocation8] sm:$0x1]
        %v1411 = vld [vmem:[#allocation10] sm:$0x1]
        %v1412 = vsel %vm654, %v1409, 0.0
        %1413 = vadd.xlane.f32.xlu0 %v1412
        %v1414 = vpop.xlane.xlu0 %1413
        %v1415 = vrcp.pop 32.0
        %v1416 = vmul.f32 %v1414, %v1415
        %v1417 = vsub.f32 %v1409, %v1416
        %v1418 = vmul.f32 %v1417, %v1417
        %v1419 = vsel %vm654, %v1418, 0.0
        %1420 = vadd.xlane.f32.xlu0 %v1419
        %v1421 = vpop.xlane.xlu0 %1420
        %v1422 = vmul.f32 %v1421, %v1415
        %v1423 = vadd.f32 %v1422, 1e-05
        %v1424 = vrsqrt.pop %v1423
        %v1425 = vmul.f32 %v1417, %v1424
        %v1427 = vlaneseq
        %v1428 = vshrl.u32 %v1427, 7
        %v1429 = vsub.s32 0, %v1428
        %v1430 = vrot.slane %v1410, %v1429
        %v1432 = vmul.f32 %v1425, %v1430
        %v1434 = vlaneseq
        %v1435 = vshrl.u32 %v1434, 7
        %v1436 = vsub.s32 0, %v1435
        %v1437 = vrot.slane %v1411, %v1436
        %v1439 = vadd.f32 %v1432, %v1437
        %v1440 = vpack.c.bf16 %v1439, %v1439
        %v1441 = vld [vmem:[%s10] sm:$0xf]
        %v1442 = vld [vmem:[%s10 + $0x4] sm:$0xf]
        %v1443 = vld [vmem:[%s10 + $0x8] sm:$0xf]
        %v1444 = vld [vmem:[%s10 + $0xc] sm:$0xf]
        %v1445 = vld [vmem:[%s11] sm:$0x1]
        %v1447 = vlaneseq
        %v1448 = vshrl.u32 %v1447, 7
        %v1449 = vsub.s32 0, %v1448
        %v1450 = vrot.slane %v1445, %v1449
        %v1456 = vunpack.c.l.b16 %v1441
        %v1457 = vunpack.c.l.b16 %v1442
        %v1458 = vunpack.c.l.b16 %v1443
        %v1459 = vunpack.c.l.b16 %v1444
        %v1460 = vpack.c.b16 %v1457, %v1456
        %v1461 = vpack.c.b16 %v1459, %v1458
        %v1465 = vsel %vm654, %v1440, 0
        %1467 = vmatprep.subr.bf16.mxu0 0
        %1468 = vmatpush1.bf16.msra.mxu0 %v1460
        %1469 = vmatprep.subr.bf16.mxu0 0
        %1470 = vmatpush1.bf16.msra.mxu0 %v1461
        %1471 = vmatprep.subr.bf16.mxu0 0
        %1472 = vmatpush1.bf16.msra.mxu0 0
        %1473 = vmatprep.subr.bf16.mxu0 0
        %1474 = vmatpush1.bf16.msra.mxu0 0
        %1475 = vmatprep.subr.bf16.mxu0 0
        %1476 = vmatpush1.bf16.msra.mxu0 0
        %1477 = vmatprep.subr.bf16.mxu0 0
        %1478 = vmatpush1.bf16.msra.mxu0 0
        %1479 = vmatprep.subr.bf16.mxu0 0
        %1480 = vmatpush1.bf16.msra.mxu0 0
        %1481 = vmatprep.subr.bf16.mxu0 0
        %1482 = vmatpush1.bf16.msra.mxu0 0
        %1483 = vmatprep.subr.bf16.mxu0 0
        %1484 = vmatpush1.bf16.msra.mxu0 0
        %1485 = vmatprep.subr.bf16.mxu0 0
        %1486 = vmatpush1.bf16.msra.mxu0 0
        %1487 = vmatprep.subr.bf16.mxu0 0
        %1488 = vmatpush1.bf16.msra.mxu0 0
        %1489 = vmatprep.subr.bf16.mxu0 0
        %1490 = vmatpush1.bf16.msra.mxu0 0
        %1491 = vmatprep.subr.bf16.mxu0 0
        %1492 = vmatpush1.bf16.msra.mxu0 0
        %1493 = vmatprep.subr.bf16.mxu0 0
        %1494 = vmatpush1.bf16.msra.mxu0 0
        %1495 = vmatprep.subr.bf16.mxu0 0
        %1496 = vmatpush1.bf16.msra.mxu0 0
        %1497 = vmatprep.subr.bf16.mxu0 0
        %1498 = vmatpush1.bf16.msra.mxu0 0
        %1499 = vmatprep.mubr.bf16.mxu0 0
        %1500 = vmatmul.mubr.bf16.gmra.mrb[0].mxu0 %v1465
        %v1501 = vpop.f32.mrb[0].mxu0
        %v1502 = vadd.f32 %v1450, %v1501
        %v1503 = vpop.f32.mrb[0].mxu0
        %v1504 = vpop.f32.mrb[0].mxu0
        %v1505 = vpop.f32.mrb[0].mxu0
        %1506 = vdwg.mxu0
        %v1507 = vmax.f32 %v1502, 0.0
        %v1508 = vpack.c.bf16 %v1507, %v1507
        %v1509 = vld [vmem:[%s12] sm:$0xf]
        %v1510 = vld [vmem:[%s12 + $0x4] sm:$0xf]
        %v1511 = vld [vmem:[%s12 + $0x8] sm:$0xf]
        %v1512 = vld [vmem:[%s12 + $0xc] sm:$0xf]
        %v1513 = vld [vmem:[%s12 + $0x10] sm:$0xf]
        %v1514 = vld [vmem:[%s12 + $0x14] sm:$0xf]
        %v1515 = vld [vmem:[%s12 + $0x18] sm:$0xf]
        %v1516 = vld [vmem:[%s12 + $0x1c] sm:$0xf]
        %v1517 = vld [vmem:[%s13] sm:$0x1]
        %v1519 = vlaneseq
        %v1520 = vshrl.u32 %v1519, 7
        %v1521 = vsub.s32 0, %v1520
        %v1522 = vrot.slane %v1517, %v1521
        %v1532 = vunpack.c.l.b16 %v1509
        %v1533 = vunpack.c.l.b16 %v1510
        %v1534 = vunpack.c.l.b16 %v1511
        %v1535 = vunpack.c.l.b16 %v1512
        %v1536 = vunpack.c.l.b16 %v1513
        %v1537 = vunpack.c.l.b16 %v1514
        %v1538 = vunpack.c.l.b16 %v1515
        %v1539 = vunpack.c.l.b16 %v1516
        %v1540 = vpack.c.b16 %v1533, %v1532
        %v1541 = vpack.c.b16 %v1535, %v1534
        %v1542 = vpack.c.b16 %v1537, %v1536
        %v1543 = vpack.c.b16 %v1539, %v1538
        %vm1548 = vcmask 523264
        %v1550 = vsel %vm1548, %v1508, 0
        %1552 = vmatprep.subr.bf16.mxu0 0
        %1553 = vmatpush1.bf16.msra.mxu0 %v1540
        %1554 = vmatprep.subr.bf16.mxu0 0
        %1555 = vmatpush1.bf16.msra.mxu0 %v1541
        %1556 = vmatprep.subr.bf16.mxu0 0
        %1557 = vmatpush1.bf16.msra.mxu0 %v1542
        %1558 = vmatprep.subr.bf16.mxu0 0
        %1559 = vmatpush1.bf16.msra.mxu0 %v1543
        %1560 = vmatprep.subr.bf16.mxu0 0
        %1561 = vmatpush1.bf16.msra.mxu0 0
        %1562 = vmatprep.subr.bf16.mxu0 0
        %1563 = vmatpush1.bf16.msra.mxu0 0
        %1564 = vmatprep.subr.bf16.mxu0 0
        %1565 = vmatpush1.bf16.msra.mxu0 0
        %1566 = vmatprep.subr.bf16.mxu0 0
        %1567 = vmatpush1.bf16.msra.mxu0 0
        %1568 = vmatprep.subr.bf16.mxu0 0
        %1569 = vmatpush1.bf16.msra.mxu0 0
        %1570 = vmatprep.subr.bf16.mxu0 0
        %1571 = vmatpush1.bf16.msra.mxu0 0
        %1572 = vmatprep.subr.bf16.mxu0 0
        %1573 = vmatpush1.bf16.msra.mxu0 0
        %1574 = vmatprep.subr.bf16.mxu0 0
        %1575 = vmatpush1.bf16.msra.mxu0 0
        %1576 = vmatprep.subr.bf16.mxu0 0
        %1577 = vmatpush1.bf16.msra.mxu0 0
        %1578 = vmatprep.subr.bf16.mxu0 0
        %1579 = vmatpush1.bf16.msra.mxu0 0
        %1580 = vmatprep.subr.bf16.mxu0 0
        %1581 = vmatpush1.bf16.msra.mxu0 0
        %1582 = vmatprep.subr.bf16.mxu0 0
        %1583 = vmatpush1.bf16.msra.mxu0 0
        %1584 = vmatprep.mubr.bf16.mxu0 0
        %1585 = vmatmul.mubr.bf16.gmra.mrb[0].mxu0 %v1550
        %v1586 = vpop.f32.mrb[0].mxu0
        %v1587 = vadd.f32 %v1522, %v1586
        %v1588 = vpop.f32.mrb[0].mxu0
        %v1589 = vpop.f32.mrb[0].mxu0
        %v1590 = vpop.f32.mrb[0].mxu0
        %1591 = vdwg.mxu0
        %v1592 = vadd.f32 %v1439, %v1587
        %v1593 = vld [vmem:[%s14] sm:$0x1]
        %v1594 = vld [vmem:[%s15] sm:$0x1]
        %v1595 = vsel %vm654, %v1592, 0.0
        %1596 = vadd.xlane.f32.xlu0 %v1595
        %v1597 = vpop.xlane.xlu0 %1596
        %v1598 = vmul.f32 %v1597, %v1415
        %v1599 = vsub.f32 %v1592, %v1598
        %v1600 = vmul.f32 %v1599, %v1599
        %v1601 = vsel %vm654, %v1600, 0.0
        %1602 = vadd.xlane.f32.xlu0 %v1601
        %v1603 = vpop.xlane.xlu0 %1602
        %v1604 = vmul.f32 %v1603, %v1415
        %v1605 = vadd.f32 %v1604, 1e-05
        %v1606 = vrsqrt.pop %v1605
        %v1607 = vmul.f32 %v1599, %v1606
        %v1609 = vlaneseq
        %v1610 = vshrl.u32 %v1609, 7
        %v1611 = vsub.s32 0, %v1610
        %v1612 = vrot.slane %v1593, %v1611
        %v1614 = vmul.f32 %v1607, %v1612
        %v1616 = vlaneseq
        %v1617 = vshrl.u32 %v1616, 7
        %v1618 = vsub.s32 0, %v1617
        %v1619 = vrot.slane %v1594, %v1618
        %v1621 = vadd.f32 %v1614, %v1619
        %1622 = vst.msk [vmem:[%s614] sm:$0xff] %vm654, %v1621
        %s1623 = sand.u32 %s403, 1
        %s1624 = scalar_lea.sflag [#allocation4], %s1623
        %s1625 = sand.u32 %s403, 1
        %s1626 = smul.addr %s1625, 8
        %s1627 = scalar_lea.vmem [#allocation11], %s1626
        // Predicated region
        $region105: #{tpu_custom_call.1} parent=83 // pred_check
          %p1628 = pneg %p413
        $region106: #{tpu_custom_call.1} parent=83 // pred_check_branch
          %1630 = sbr.rel (%p1628) target = $region108
        $region107: #{tpu_custom_call.1} parent=83 // pred_region
          %s1632 = ssub.s32 128, 128
          %1633 = vsyncadd %s1624, %s1632
          %s1634 = sadd.s32 %s38, %s37
          %s1635 = smul.addr %s1634, 128
          %s1636 = scalar_lea.hbm %s16, %s1635
          %s1638 = sshll.u32 %s1627, 4
          %s1639 = int_to_ptr.vmem [resolvable:$true] %s1638
          %1641 = dma.vmem_to_hbm [thread:$0]  %s1639, 128, %s1636, %s1624
        $region108: #{tpu_custom_call.1} parent=83 // pred_fallthru
          _
      $region84: #{tpu_custom_call.1} parent=5 // pred_fallthru
        _
      %p1642 = scmp.le.s32.totalorder 2, %s28
      // Predicated region
      $region109: #{tpu_custom_call.1} parent=5 // pred_check
        %p1643 = pneg %p1642
      $region110: #{tpu_custom_call.1} parent=5 // pred_check_branch
        %1645 = sbr.rel (%p1643) target = $region112
      $region111: #{tpu_custom_call.1} parent=5 // pred_region
        %s1646 = ssub.s32 %s28, 2
        // Predicated region
        $region113: #{tpu_custom_call.1} parent=111 // pred_check
          %p1647 = pneg %p419
        $region114: #{tpu_custom_call.1} parent=111 // pred_check_branch
          %1649 = sbr.rel (%p1647) target = $region116
        $region115: #{tpu_custom_call.1} parent=111 // pred_region
          %s1650 = sand.u32 %s404, 1
          %s1651 = scalar_lea.sflag [#allocation4], %s1650
          %s1652 = sand.u32 %s404, 1
          %s1653 = smul.addr %s1652, 8
          %s1654 = scalar_lea.vmem [#allocation11], %s1653
          %1655 = dma.done %s1651, 128
        $region116: #{tpu_custom_call.1} parent=111 // pred_fallthru
          _
      $region112: #{tpu_custom_call.1} parent=5 // pred_fallthru
        _
    $region6: #{tpu_custom_call.1} parent=1 // loop_footer
      %s32 = sadd.s32 1, %s28
    $region7: #{tpu_custom_call.1} parent=1 // loop_footer_branch
      %27 = sbr.rel target = $region3
    $region8: #{tpu_custom_call.1} parent=1 // loop_exit
      _
    %1656 = vsyncpa [#allocation3], 1
    %s1657 = scalar_lea.sflag [#allocation3], 1
    %1658 = vsyncpa %s1657, 1
    %1659 = vsyncpa [#allocation6], 1
    %1660 = vsyncpa [#allocation9], 1
    %1661 = vsyncpa [#allocation4], 1
    %s1662 = scalar_lea.sflag [#allocation4], 1
    %1663 = vsyncpa %s1662, 1

</llo_original>
